<compile_context>
chip_gen: v7x
topology: tpu7x:2x2x1
jax: 0.10.0
libtpu: 0.0.40
codegen_flags: <defaults>
</compile_context>

<pallas_src>
import functools

import jax
import jax.numpy as jnp
from jax.experimental import pallas as pl
from jax.experimental.pallas import tpu as pltpu

_EPS = 1e-5      # nn.BatchNorm2d default
_ALPHA = 0.2     # LeakyReLU negative slope


def _double_conv_kernel(x_ref, mask_ref, w1_ref, p1_ref, w2_ref, p2_ref,
                        out_ref, *, W):
    """Shapes (all VMEM-resident):
      x_ref:    (N, Cin, H*W)     activations, channels on sublanes, spatial on lanes
      mask_ref: (9, H*W)          {0,1} edge-validity mask per 3x3 tap
      w1_ref:   (Cmid, 9*Cin)     conv1 weights, columns ordered (tap, cin)
      p1_ref:   (Cmid, 3)         columns = [conv_bias, bn_gamma, bn_beta]
      w2_ref:   (Cout, 9*Cmid)
      p2_ref:   (Cout, 3)
      out_ref:  (N, Cout, H*W)    lane-dense output (already NCHW-ordered)
    """
    N, _, HW = x_ref.shape
    Cmid = w1_ref.shape[0]
    Cout = w2_ref.shape[0]

    # ---- 3x3 tap geometry (hoisted; shared by both convs and all images) ----
    tmask = mask_ref[...]                                   # (9, HW)
    tap_mask = [tmask[k:k + 1, :] for k in range(9)]        # each (1, HW)
    tap_shift = [((k // 3 - 1) * W + (k % 3 - 1)) % HW for k in range(9)]

    def im2col(img):
        # img: (C, HW) -> patches (9*C, HW); row block k holds
        # x[c, y + dy - 1, x + dx - 1] (zero outside the image), k = dy*3 + dx.
        taps = []
        for k in range(9):
            s = tap_shift[k]
            if s == 0:
                shifted = img
            else:
                # shifted[p] = img[(p + s) mod HW]; the wrapped lanes land on
                # positions that the edge mask zeroes out anyway.
                shifted = jnp.concatenate([img[:, s:], img[:, :s]], axis=1)
            taps.append(shifted * tap_mask[k])
        return jnp.concatenate(taps, axis=0)

    w1 = w1_ref[...]
    w2 = w2_ref[...]
    p1 = p1_ref[...]
    p2 = p2_ref[...]
    b1, g1, be1 = p1[:, 0:1], p1[:, 1:2], p1[:, 2:3]
    b2, g2, be2 = p2[:, 0:1], p2[:, 1:2], p2[:, 2:3]
    inv_cnt = 1.0 / float(N * HW)

    # ---- conv1: one K=9*Cin matmul per image, BN stats fused (sum / sumsq) ----
    h1 = []
    s1 = jnp.zeros((Cmid, 1), jnp.float32)
    q1 = jnp.zeros((Cmid, 1), jnp.float32)
    for n in range(N):
        h = jnp.dot(w1, im2col(x_ref[n]),
                    preferred_element_type=jnp.float32) + b1   # (Cmid, HW)
        h1.append(h)
        s1 = s1 + jnp.sum(h, axis=1, keepdims=True)
        q1 = q1 + jnp.sum(h * h, axis=1, keepdims=True)
    m1 = s1 * inv_cnt
    v1 = jnp.maximum(q1 * inv_cnt - m1 * m1, 0.0)
    sc1 = g1 * jax.lax.rsqrt(v1 + _EPS)
    sh1 = be1 - m1 * sc1

    # ---- BN1 + LeakyReLU, then conv2 (K=9*Cmid) with fused BN stats ----
    h2 = []
    s2 = jnp.zeros((Cout, 1), jnp.float32)
    q2 = jnp.zeros((Cout, 1), jnp.float32)
    for n in range(N):
        a = h1[n] * sc1 + sh1
        a = jnp.where(a > 0, a, _ALPHA * a)
        h = jnp.dot(w2, im2col(a),
                    preferred_element_type=jnp.float32) + b2   # (Cout, HW)
        h2.append(h)
        s2 = s2 + jnp.sum(h, axis=1, keepdims=True)
        q2 = q2 + jnp.sum(h * h, axis=1, keepdims=True)
    m2 = s2 * inv_cnt
    v2 = jnp.maximum(q2 * inv_cnt - m2 * m2, 0.0)
    sc2 = g2 * jax.lax.rsqrt(v2 + _EPS)
    sh2 = be2 - m2 * sc2

    # ---- BN2 + LeakyReLU, lane-dense unmasked stores ----
    for n in range(N):
        a = h2[n] * sc2 + sh2
        a = jnp.where(a > 0, a, _ALPHA * a)
        out_ref[n, :, :] = a.astype(out_ref.dtype)


@jax.jit
def double_conv(x_nchw, w1, b1, g1, be1, w2, b2, g2, be2):
    """PyTorch-equivalent DoubleConv forward. x_nchw: (N, Cin, H, W) -> (N, Cout, H, W)."""
    N, Cin, H, W = x_nchw.shape
    Cmid = w1.shape[0]
    Cout = w2.shape[0]
    HW = H * W

    # Free reshape (no transpose, no pad, no extra HBM relayout passes).
    x = x_nchw.reshape(N, Cin, HW).astype(jnp.float32)

    # Per-tap edge validity masks (constant, 9*HW floats), built host/XLA-side.
    ii = jnp.arange(HW, dtype=jnp.int32)
    yy = ii // W
    xx = ii % W
    tapmask = jnp.stack(
        [((yy + (k // 3 - 1) >= 0) & (yy + (k // 3 - 1) < H) &
          (xx + (k % 3 - 1) >= 0) & (xx + (k % 3 - 1) < W)).astype(jnp.float32)
         for k in range(9)], axis=0)                             # (9, HW)

    # Conv weights (Cout, Cin, 3, 3) -> (Cout, 9*Cin), columns ordered
    # (tap-major, cin-minor) to match the in-kernel im2col row order.
    w1m = jnp.transpose(w1, (0, 2, 3, 1)).reshape(Cmid, 9 * Cin).astype(jnp.float32)
    w2m = jnp.transpose(w2, (0, 2, 3, 1)).reshape(Cout, 9 * Cmid).astype(jnp.float32)
    p1 = jnp.stack([b1, g1, be1], axis=1).astype(jnp.float32)    # (Cmid, 3)
    p2 = jnp.stack([b2, g2, be2], axis=1).astype(jnp.float32)    # (Cout, 3)

    # TODO(synk): at production UNet sizes, tile the grid over batch/row blocks
    # ("parallel" so v7x's 2 TensorCores both get work, halo via index_map) with
    # a two-phase sum/sumsq BN reduction, and feed the MXU bf16 activations on
    # v6e/v7x; at this test size a single VMEM-resident block is correct and
    # fastest, and f32 keeps exact parity with the PyTorch/f32 reference.
    out = pl.pallas_call(
        functools.partial(_double_conv_kernel, W=W),
        out_shape=jax.ShapeDtypeStruct((N, Cout, HW), jnp.float32),
        grid=(1,),
        in_specs=[
            pl.BlockSpec((N, Cin, HW), lambda i: (0, 0, 0)),
            pl.BlockSpec((9, HW), lambda i: (0, 0)),
            pl.BlockSpec((Cmid, 9 * Cin), lambda i: (0, 0)),
            pl.BlockSpec((Cmid, 3), lambda i: (0, 0)),
            pl.BlockSpec((Cout, 9 * Cmid), lambda i: (0, 0)),
            pl.BlockSpec((Cout, 3), lambda i: (0, 0)),
        ],
        out_specs=pl.BlockSpec((N, Cout, HW), lambda i: (0, 0, 0)),
        compiler_params=pltpu.CompilerParams(
            dimension_semantics=("arbitrary",)),
    )(x, tapmask, w1m, p1, w2m, p2)

    # (N, Cout, H*W) is already NCHW-ordered; reshape back is free.
    return out.reshape(N, Cout, H, W)


def _reference(x, w1, b1, g1, be1, w2, b2, g2, be2):
    """Pure-JAX reference mirroring the PyTorch module (training-mode BN)."""
    def conv(x, w, b):
        y = jax.lax.conv_general_dilated(
            x, w, window_strides=(1, 1), padding="SAME",
            dimension_numbers=("NCHW", "OIHW", "NCHW"))
        return y + b[None, :, None, None]

    def bn(x, g, be):
        mean = jnp.mean(x, axis=(0, 2, 3), keepdims=True)
        var = jnp.mean((x - mean) ** 2, axis=(0, 2, 3), keepdims=True)
        return ((x - mean) * jax.lax.rsqrt(var + 1e-5)
                * g[None, :, None, None] + be[None, :, None, None])

    def lrelu(x):
        return jnp.where(x > 0, x, 0.2 * x)

    h = lrelu(bn(conv(x, w1, b1), g1, be1))
    return lrelu(bn(conv(h, w2, b2), g2, be2))


if __name__ == "__main__":
    N, Cin, H, W = 2, 4, 16, 16
    Cmid = Cout = 8   # mid_channels defaults to out_channels

    key = jax.random.PRNGKey(0)
    ks = jax.random.split(key, 9)
    x = jax.random.normal(ks[0], (N, Cin, H, W), jnp.float32)

    # Deterministic synthetic parameters (shapes per nn.Conv2d / nn.BatchNorm2d).
    w1 = 0.1 * jax.random.normal(ks[1], (Cmid, Cin, 3, 3), jnp.float32)
    b1 = 0.1 * jax.random.normal(ks[2], (Cmid,), jnp.float32)
    g1 = 1.0 + 0.1 * jax.random.normal(ks[3], (Cmid,), jnp.float32)
    be1 = 0.1 * jax.random.normal(ks[4], (Cmid,), jnp.float32)
    w2 = 0.1 * jax.random.normal(ks[5], (Cout, Cmid, 3, 3), jnp.float32)
    b2 = 0.1 * jax.random.normal(ks[6], (Cout,), jnp.float32)
    g2 = 1.0 + 0.1 * jax.random.normal(ks[7], (Cout,), jnp.float32)
    be2 = 0.1 * jax.random.normal(ks[8], (Cout,), jnp.float32)

    out = double_conv(x, w1, b1, g1, be1, w2, b2, g2, be2)
    out = jax.block_until_ready(out)

    ref = _reference(x, w1, b1, g1, be1, w2, b2, g2, be2)
    assert out.shape == (N, Cout, H, W), out.shape
    assert jnp.allclose(out, ref, atol=1e-4, rtol=1e-4), float(
        jnp.max(jnp.abs(out - ref)))

    print("KERNEL_OK")
</pallas_src>

<mosaic_0001>
module attributes {stable_mosaic.version = 11 : i64} {
  func.func @_double_conv_kernel(%arg0: i32, %arg1: memref<2x4x256xf32, #tpu.memory_space<vmem>>, %arg2: memref<9x256xf32, #tpu.memory_space<vmem>>, %arg3: memref<8x36xf32, #tpu.memory_space<vmem>>, %arg4: memref<8x3xf32, #tpu.memory_space<vmem>>, %arg5: memref<8x72xf32, #tpu.memory_space<vmem>>, %arg6: memref<8x3xf32, #tpu.memory_space<vmem>>, %arg7: memref<2x8x256xf32, #tpu.memory_space<vmem>>) attributes {dimension_semantics = [#tpu.dimension_semantics<arbitrary>], iteration_bounds = array<i64: 1>, scalar_prefetch = 0 : i64, scratch_operands = 0 : i64, tpu.core_type = #tpu.core_type<tc>, window_params = [{pipeline_mode = #tpu.pipeline_mode<synchronous>, transform_indices = @transform_0, window_bounds = array<i64: 2, 4, 256>}, {pipeline_mode = #tpu.pipeline_mode<synchronous>, transform_indices = @transform_1, window_bounds = array<i64: 9, 256>}, {pipeline_mode = #tpu.pipeline_mode<synchronous>, transform_indices = @transform_2, window_bounds = array<i64: 8, 36>}, {pipeline_mode = #tpu.pipeline_mode<synchronous>, transform_indices = @transform_3, window_bounds = array<i64: 8, 3>}, {pipeline_mode = #tpu.pipeline_mode<synchronous>, transform_indices = @transform_4, window_bounds = array<i64: 8, 72>}, {pipeline_mode = #tpu.pipeline_mode<synchronous>, transform_indices = @transform_5, window_bounds = array<i64: 8, 3>}, {pipeline_mode = #tpu.pipeline_mode<synchronous>, transform_indices = @transform_6, window_bounds = array<i64: 2, 8, 256>}]} {
    %c0 = arith.constant 0 : index
    %c0_0 = arith.constant 0 : index
    %0 = vector.load %arg2[%c0, %c0_0] : memref<9x256xf32, #tpu.memory_space<vmem>>, vector<9x256xf32>
    %1 = vector.extract_strided_slice %0 {offsets = [0, 0], sizes = [1, 256], strides = [1, 1]} : vector<9x256xf32> to vector<1x256xf32>
    %2 = vector.extract_strided_slice %0 {offsets = [1, 0], sizes = [1, 256], strides = [1, 1]} : vector<9x256xf32> to vector<1x256xf32>
    %3 = vector.extract_strided_slice %0 {offsets = [2, 0], sizes = [1, 256], strides = [1, 1]} : vector<9x256xf32> to vector<1x256xf32>
    %4 = vector.extract_strided_slice %0 {offsets = [3, 0], sizes = [1, 256], strides = [1, 1]} : vector<9x256xf32> to vector<1x256xf32>
    %5 = vector.extract_strided_slice %0 {offsets = [4, 0], sizes = [1, 256], strides = [1, 1]} : vector<9x256xf32> to vector<1x256xf32>
    %6 = vector.extract_strided_slice %0 {offsets = [5, 0], sizes = [1, 256], strides = [1, 1]} : vector<9x256xf32> to vector<1x256xf32>
    %7 = vector.extract_strided_slice %0 {offsets = [6, 0], sizes = [1, 256], strides = [1, 1]} : vector<9x256xf32> to vector<1x256xf32>
    %8 = vector.extract_strided_slice %0 {offsets = [7, 0], sizes = [1, 256], strides = [1, 1]} : vector<9x256xf32> to vector<1x256xf32>
    %9 = vector.extract_strided_slice %0 {offsets = [8, 0], sizes = [1, 256], strides = [1, 1]} : vector<9x256xf32> to vector<1x256xf32>
    %c0_1 = arith.constant 0 : index
    %c0_2 = arith.constant 0 : index
    %10 = vector.load %arg3[%c0_1, %c0_2] : memref<8x36xf32, #tpu.memory_space<vmem>>, vector<8x36xf32>
    %c0_3 = arith.constant 0 : index
    %c0_4 = arith.constant 0 : index
    %11 = vector.load %arg5[%c0_3, %c0_4] : memref<8x72xf32, #tpu.memory_space<vmem>>, vector<8x72xf32>
    %c0_5 = arith.constant 0 : index
    %c0_6 = arith.constant 0 : index
    %12 = vector.load %arg4[%c0_5, %c0_6] : memref<8x3xf32, #tpu.memory_space<vmem>>, vector<8x3xf32>
    %c0_7 = arith.constant 0 : index
    %c0_8 = arith.constant 0 : index
    %13 = vector.load %arg6[%c0_7, %c0_8] : memref<8x3xf32, #tpu.memory_space<vmem>>, vector<8x3xf32>
    %14 = vector.extract_strided_slice %12 {offsets = [0, 0], sizes = [8, 1], strides = [1, 1]} : vector<8x3xf32> to vector<8x1xf32>
    %15 = vector.extract_strided_slice %12 {offsets = [0, 1], sizes = [8, 1], strides = [1, 1]} : vector<8x3xf32> to vector<8x1xf32>
    %16 = vector.extract_strided_slice %12 {offsets = [0, 2], sizes = [8, 1], strides = [1, 1]} : vector<8x3xf32> to vector<8x1xf32>
    %17 = vector.extract_strided_slice %13 {offsets = [0, 0], sizes = [8, 1], strides = [1, 1]} : vector<8x3xf32> to vector<8x1xf32>
    %18 = vector.extract_strided_slice %13 {offsets = [0, 1], sizes = [8, 1], strides = [1, 1]} : vector<8x3xf32> to vector<8x1xf32>
    %19 = vector.extract_strided_slice %13 {offsets = [0, 2], sizes = [8, 1], strides = [1, 1]} : vector<8x3xf32> to vector<8x1xf32>
    %cst = arith.constant 0.000000e+00 : f32
    %20 = vector.broadcast %cst : f32 to vector<8x1xf32>
    %cst_9 = arith.constant 0.000000e+00 : f32
    %21 = vector.broadcast %cst_9 : f32 to vector<8x1xf32>
    %c0_10 = arith.constant 0 : index
    %c0_11 = arith.constant 0 : index
    %c0_12 = arith.constant 0 : index
    %22 = vector.load %arg1[%c0_10, %c0_11, %c0_12] : memref<2x4x256xf32, #tpu.memory_space<vmem>>, vector<1x4x256xf32>
    %23 = vector.shape_cast %22 : vector<1x4x256xf32> to vector<4x256xf32>
    %24 = vector.extract_strided_slice %23 {offsets = [0, 239], sizes = [4, 17], strides = [1, 1]} : vector<4x256xf32> to vector<4x17xf32>
    %25 = vector.extract_strided_slice %23 {offsets = [0, 0], sizes = [4, 239], strides = [1, 1]} : vector<4x256xf32> to vector<4x239xf32>
    %26 = tpu.concatenate %24, %25 in 1 : vector<4x17xf32>, vector<4x239xf32> -> vector<4x256xf32>
    %27 = vector.broadcast %1 : vector<1x256xf32> to vector<4x256xf32>
    %28 = arith.mulf %26, %27 : vector<4x256xf32>
    %29 = vector.extract_strided_slice %23 {offsets = [0, 240], sizes = [4, 16], strides = [1, 1]} : vector<4x256xf32> to vector<4x16xf32>
    %30 = vector.extract_strided_slice %23 {offsets = [0, 0], sizes = [4, 240], strides = [1, 1]} : vector<4x256xf32> to vector<4x240xf32>
    %31 = tpu.concatenate %29, %30 in 1 : vector<4x16xf32>, vector<4x240xf32> -> vector<4x256xf32>
    %32 = vector.broadcast %2 : vector<1x256xf32> to vector<4x256xf32>
    %33 = arith.mulf %31, %32 : vector<4x256xf32>
    %34 = vector.extract_strided_slice %23 {offsets = [0, 241], sizes = [4, 15], strides = [1, 1]} : vector<4x256xf32> to vector<4x15xf32>
    %35 = vector.extract_strided_slice %23 {offsets = [0, 0], sizes = [4, 241], strides = [1, 1]} : vector<4x256xf32> to vector<4x241xf32>
    %36 = tpu.concatenate %34, %35 in 1 : vector<4x15xf32>, vector<4x241xf32> -> vector<4x256xf32>
    %37 = vector.broadcast %3 : vector<1x256xf32> to vector<4x256xf32>
    %38 = arith.mulf %36, %37 : vector<4x256xf32>
    %39 = vector.extract_strided_slice %23 {offsets = [0, 255], sizes = [4, 1], strides = [1, 1]} : vector<4x256xf32> to vector<4x1xf32>
    %40 = vector.extract_strided_slice %23 {offsets = [0, 0], sizes = [4, 255], strides = [1, 1]} : vector<4x256xf32> to vector<4x255xf32>
    %41 = tpu.concatenate %39, %40 in 1 : vector<4x1xf32>, vector<4x255xf32> -> vector<4x256xf32>
    %42 = vector.broadcast %4 : vector<1x256xf32> to vector<4x256xf32>
    %43 = arith.mulf %41, %42 : vector<4x256xf32>
    %44 = vector.broadcast %5 : vector<1x256xf32> to vector<4x256xf32>
    %45 = arith.mulf %23, %44 : vector<4x256xf32>
    %46 = vector.extract_strided_slice %23 {offsets = [0, 1], sizes = [4, 255], strides = [1, 1]} : vector<4x256xf32> to vector<4x255xf32>
    %47 = vector.extract_strided_slice %23 {offsets = [0, 0], sizes = [4, 1], strides = [1, 1]} : vector<4x256xf32> to vector<4x1xf32>
    %48 = tpu.concatenate %46, %47 in 1 : vector<4x255xf32>, vector<4x1xf32> -> vector<4x256xf32>
    %49 = vector.broadcast %6 : vector<1x256xf32> to vector<4x256xf32>
    %50 = arith.mulf %48, %49 : vector<4x256xf32>
    %51 = vector.extract_strided_slice %23 {offsets = [0, 15], sizes = [4, 241], strides = [1, 1]} : vector<4x256xf32> to vector<4x241xf32>
    %52 = vector.extract_strided_slice %23 {offsets = [0, 0], sizes = [4, 15], strides = [1, 1]} : vector<4x256xf32> to vector<4x15xf32>
    %53 = tpu.concatenate %51, %52 in 1 : vector<4x241xf32>, vector<4x15xf32> -> vector<4x256xf32>
    %54 = vector.broadcast %7 : vector<1x256xf32> to vector<4x256xf32>
    %55 = arith.mulf %53, %54 : vector<4x256xf32>
    %56 = vector.extract_strided_slice %23 {offsets = [0, 16], sizes = [4, 240], strides = [1, 1]} : vector<4x256xf32> to vector<4x240xf32>
    %57 = vector.extract_strided_slice %23 {offsets = [0, 0], sizes = [4, 16], strides = [1, 1]} : vector<4x256xf32> to vector<4x16xf32>
    %58 = tpu.concatenate %56, %57 in 1 : vector<4x240xf32>, vector<4x16xf32> -> vector<4x256xf32>
    %59 = vector.broadcast %8 : vector<1x256xf32> to vector<4x256xf32>
    %60 = arith.mulf %58, %59 : vector<4x256xf32>
    %61 = vector.extract_strided_slice %23 {offsets = [0, 17], sizes = [4, 239], strides = [1, 1]} : vector<4x256xf32> to vector<4x239xf32>
    %62 = vector.extract_strided_slice %23 {offsets = [0, 0], sizes = [4, 17], strides = [1, 1]} : vector<4x256xf32> to vector<4x17xf32>
    %63 = tpu.concatenate %61, %62 in 1 : vector<4x239xf32>, vector<4x17xf32> -> vector<4x256xf32>
    %64 = vector.broadcast %9 : vector<1x256xf32> to vector<4x256xf32>
    %65 = arith.mulf %63, %64 : vector<4x256xf32>
    %66 = tpu.concatenate %28, %33, %38, %43, %45, %50, %55, %60, %65 in 0 : vector<4x256xf32>, vector<4x256xf32>, vector<4x256xf32>, vector<4x256xf32>, vector<4x256xf32>, vector<4x256xf32>, vector<4x256xf32>, vector<4x256xf32>, vector<4x256xf32> -> vector<36x256xf32>
    %cst_13 = arith.constant dense<0.000000e+00> : vector<8x256xf32>
    %67 = tpu.matmul %10, %66, %cst_13 {dimension_numbers = #tpu.dot_dimension_numbers<[1], [0], [0], [1], [0, 0, 1, 1], [], []>} : vector<8x36xf32>, vector<36x256xf32>, vector<8x256xf32> -> vector<8x256xf32>
    %68 = vector.broadcast %14 : vector<8x1xf32> to vector<8x256xf32>
    %69 = arith.addf %67, %68 : vector<8x256xf32>
    %cst_14 = arith.constant dense<0.000000e+00> : vector<8xf32>
    %70 = vector.multi_reduction <add>, %69, %cst_14 [1] : vector<8x256xf32> to vector<8xf32>
    %71 = vector.shape_cast %70 : vector<8xf32> to vector<8x1xf32>
    %72 = arith.addf %20, %71 : vector<8x1xf32>
    %73 = arith.mulf %69, %69 : vector<8x256xf32>
    %cst_15 = arith.constant dense<0.000000e+00> : vector<8xf32>
    %74 = vector.multi_reduction <add>, %73, %cst_15 [1] : vector<8x256xf32> to vector<8xf32>
    %75 = vector.shape_cast %74 : vector<8xf32> to vector<8x1xf32>
    %76 = arith.addf %21, %75 : vector<8x1xf32>
    %c1 = arith.constant 1 : index
    %c0_16 = arith.constant 0 : index
    %c0_17 = arith.constant 0 : index
    %77 = vector.load %arg1[%c1, %c0_16, %c0_17] : memref<2x4x256xf32, #tpu.memory_space<vmem>>, vector<1x4x256xf32>
    %78 = vector.shape_cast %77 : vector<1x4x256xf32> to vector<4x256xf32>
    %79 = vector.extract_strided_slice %78 {offsets = [0, 239], sizes = [4, 17], strides = [1, 1]} : vector<4x256xf32> to vector<4x17xf32>
    %80 = vector.extract_strided_slice %78 {offsets = [0, 0], sizes = [4, 239], strides = [1, 1]} : vector<4x256xf32> to vector<4x239xf32>
    %81 = tpu.concatenate %79, %80 in 1 : vector<4x17xf32>, vector<4x239xf32> -> vector<4x256xf32>
    %82 = vector.broadcast %1 : vector<1x256xf32> to vector<4x256xf32>
    %83 = arith.mulf %81, %82 : vector<4x256xf32>
    %84 = vector.extract_strided_slice %78 {offsets = [0, 240], sizes = [4, 16], strides = [1, 1]} : vector<4x256xf32> to vector<4x16xf32>
    %85 = vector.extract_strided_slice %78 {offsets = [0, 0], sizes = [4, 240], strides = [1, 1]} : vector<4x256xf32> to vector<4x240xf32>
    %86 = tpu.concatenate %84, %85 in 1 : vector<4x16xf32>, vector<4x240xf32> -> vector<4x256xf32>
    %87 = vector.broadcast %2 : vector<1x256xf32> to vector<4x256xf32>
    %88 = arith.mulf %86, %87 : vector<4x256xf32>
    %89 = vector.extract_strided_slice %78 {offsets = [0, 241], sizes = [4, 15], strides = [1, 1]} : vector<4x256xf32> to vector<4x15xf32>
    %90 = vector.extract_strided_slice %78 {offsets = [0, 0], sizes = [4, 241], strides = [1, 1]} : vector<4x256xf32> to vector<4x241xf32>
    %91 = tpu.concatenate %89, %90 in 1 : vector<4x15xf32>, vector<4x241xf32> -> vector<4x256xf32>
    %92 = vector.broadcast %3 : vector<1x256xf32> to vector<4x256xf32>
    %93 = arith.mulf %91, %92 : vector<4x256xf32>
    %94 = vector.extract_strided_slice %78 {offsets = [0, 255], sizes = [4, 1], strides = [1, 1]} : vector<4x256xf32> to vector<4x1xf32>
    %95 = vector.extract_strided_slice %78 {offsets = [0, 0], sizes = [4, 255], strides = [1, 1]} : vector<4x256xf32> to vector<4x255xf32>
    %96 = tpu.concatenate %94, %95 in 1 : vector<4x1xf32>, vector<4x255xf32> -> vector<4x256xf32>
    %97 = vector.broadcast %4 : vector<1x256xf32> to vector<4x256xf32>
    %98 = arith.mulf %96, %97 : vector<4x256xf32>
    %99 = vector.broadcast %5 : vector<1x256xf32> to vector<4x256xf32>
    %100 = arith.mulf %78, %99 : vector<4x256xf32>
    %101 = vector.extract_strided_slice %78 {offsets = [0, 1], sizes = [4, 255], strides = [1, 1]} : vector<4x256xf32> to vector<4x255xf32>
    %102 = vector.extract_strided_slice %78 {offsets = [0, 0], sizes = [4, 1], strides = [1, 1]} : vector<4x256xf32> to vector<4x1xf32>
    %103 = tpu.concatenate %101, %102 in 1 : vector<4x255xf32>, vector<4x1xf32> -> vector<4x256xf32>
    %104 = vector.broadcast %6 : vector<1x256xf32> to vector<4x256xf32>
    %105 = arith.mulf %103, %104 : vector<4x256xf32>
    %106 = vector.extract_strided_slice %78 {offsets = [0, 15], sizes = [4, 241], strides = [1, 1]} : vector<4x256xf32> to vector<4x241xf32>
    %107 = vector.extract_strided_slice %78 {offsets = [0, 0], sizes = [4, 15], strides = [1, 1]} : vector<4x256xf32> to vector<4x15xf32>
    %108 = tpu.concatenate %106, %107 in 1 : vector<4x241xf32>, vector<4x15xf32> -> vector<4x256xf32>
    %109 = vector.broadcast %7 : vector<1x256xf32> to vector<4x256xf32>
    %110 = arith.mulf %108, %109 : vector<4x256xf32>
    %111 = vector.extract_strided_slice %78 {offsets = [0, 16], sizes = [4, 240], strides = [1, 1]} : vector<4x256xf32> to vector<4x240xf32>
    %112 = vector.extract_strided_slice %78 {offsets = [0, 0], sizes = [4, 16], strides = [1, 1]} : vector<4x256xf32> to vector<4x16xf32>
    %113 = tpu.concatenate %111, %112 in 1 : vector<4x240xf32>, vector<4x16xf32> -> vector<4x256xf32>
    %114 = vector.broadcast %8 : vector<1x256xf32> to vector<4x256xf32>
    %115 = arith.mulf %113, %114 : vector<4x256xf32>
    %116 = vector.extract_strided_slice %78 {offsets = [0, 17], sizes = [4, 239], strides = [1, 1]} : vector<4x256xf32> to vector<4x239xf32>
    %117 = vector.extract_strided_slice %78 {offsets = [0, 0], sizes = [4, 17], strides = [1, 1]} : vector<4x256xf32> to vector<4x17xf32>
    %118 = tpu.concatenate %116, %117 in 1 : vector<4x239xf32>, vector<4x17xf32> -> vector<4x256xf32>
    %119 = vector.broadcast %9 : vector<1x256xf32> to vector<4x256xf32>
    %120 = arith.mulf %118, %119 : vector<4x256xf32>
    %121 = tpu.concatenate %83, %88, %93, %98, %100, %105, %110, %115, %120 in 0 : vector<4x256xf32>, vector<4x256xf32>, vector<4x256xf32>, vector<4x256xf32>, vector<4x256xf32>, vector<4x256xf32>, vector<4x256xf32>, vector<4x256xf32>, vector<4x256xf32> -> vector<36x256xf32>
    %cst_18 = arith.constant dense<0.000000e+00> : vector<8x256xf32>
    %122 = tpu.matmul %10, %121, %cst_18 {dimension_numbers = #tpu.dot_dimension_numbers<[1], [0], [0], [1], [0, 0, 1, 1], [], []>} : vector<8x36xf32>, vector<36x256xf32>, vector<8x256xf32> -> vector<8x256xf32>
    %123 = vector.broadcast %14 : vector<8x1xf32> to vector<8x256xf32>
    %124 = arith.addf %122, %123 : vector<8x256xf32>
    %cst_19 = arith.constant dense<0.000000e+00> : vector<8xf32>
    %125 = vector.multi_reduction <add>, %124, %cst_19 [1] : vector<8x256xf32> to vector<8xf32>
    %126 = vector.shape_cast %125 : vector<8xf32> to vector<8x1xf32>
    %127 = arith.addf %72, %126 : vector<8x1xf32>
    %128 = arith.mulf %124, %124 : vector<8x256xf32>
    %cst_20 = arith.constant dense<0.000000e+00> : vector<8xf32>
    %129 = vector.multi_reduction <add>, %128, %cst_20 [1] : vector<8x256xf32> to vector<8xf32>
    %130 = vector.shape_cast %129 : vector<8xf32> to vector<8x1xf32>
    %131 = arith.addf %76, %130 : vector<8x1xf32>
    %cst_21 = arith.constant 0.001953125 : f32
    %132 = vector.broadcast %cst_21 : f32 to vector<8x1xf32>
    %133 = arith.mulf %127, %132 : vector<8x1xf32>
    %cst_22 = arith.constant 0.001953125 : f32
    %134 = vector.broadcast %cst_22 : f32 to vector<8x1xf32>
    %135 = arith.mulf %131, %134 : vector<8x1xf32>
    %136 = arith.mulf %133, %133 : vector<8x1xf32>
    %137 = arith.subf %135, %136 : vector<8x1xf32>
    %cst_23 = arith.constant 0.000000e+00 : f32
    %138 = vector.broadcast %cst_23 : f32 to vector<8x1xf32>
    %139 = arith.maximumf %137, %138 : vector<8x1xf32>
    %cst_24 = arith.constant 9.99999974E-6 : f32
    %140 = vector.broadcast %cst_24 : f32 to vector<8x1xf32>
    %141 = arith.addf %139, %140 : vector<8x1xf32>
    %142 = math.rsqrt %141 : vector<8x1xf32>
    %143 = arith.mulf %15, %142 : vector<8x1xf32>
    %144 = arith.mulf %133, %143 : vector<8x1xf32>
    %145 = arith.subf %16, %144 : vector<8x1xf32>
    %cst_25 = arith.constant 0.000000e+00 : f32
    %146 = vector.broadcast %cst_25 : f32 to vector<8x1xf32>
    %cst_26 = arith.constant 0.000000e+00 : f32
    %147 = vector.broadcast %cst_26 : f32 to vector<8x1xf32>
    %148 = vector.broadcast %143 : vector<8x1xf32> to vector<8x256xf32>
    %149 = arith.mulf %69, %148 : vector<8x256xf32>
    %150 = vector.broadcast %145 : vector<8x1xf32> to vector<8x256xf32>
    %151 = arith.addf %149, %150 : vector<8x256xf32>
    %cst_27 = arith.constant 0.000000e+00 : f32
    %152 = vector.broadcast %cst_27 : f32 to vector<8x256xf32>
    %153 = arith.cmpf ogt, %151, %152 : vector<8x256xf32>
    %cst_28 = arith.constant 2.000000e-01 : f32
    %154 = vector.broadcast %cst_28 : f32 to vector<8x256xf32>
    %155 = arith.mulf %154, %151 : vector<8x256xf32>
    %156 = arith.select %153, %151, %155 : vector<8x256xi1>, vector<8x256xf32>
    %157 = vector.extract_strided_slice %156 {offsets = [0, 239], sizes = [8, 17], strides = [1, 1]} : vector<8x256xf32> to vector<8x17xf32>
    %158 = vector.extract_strided_slice %156 {offsets = [0, 0], sizes = [8, 239], strides = [1, 1]} : vector<8x256xf32> to vector<8x239xf32>
    %159 = tpu.concatenate %157, %158 in 1 : vector<8x17xf32>, vector<8x239xf32> -> vector<8x256xf32>
    %160 = vector.broadcast %1 : vector<1x256xf32> to vector<8x256xf32>
    %161 = arith.mulf %159, %160 : vector<8x256xf32>
    %162 = vector.extract_strided_slice %156 {offsets = [0, 240], sizes = [8, 16], strides = [1, 1]} : vector<8x256xf32> to vector<8x16xf32>
    %163 = vector.extract_strided_slice %156 {offsets = [0, 0], sizes = [8, 240], strides = [1, 1]} : vector<8x256xf32> to vector<8x240xf32>
    %164 = tpu.concatenate %162, %163 in 1 : vector<8x16xf32>, vector<8x240xf32> -> vector<8x256xf32>
    %165 = vector.broadcast %2 : vector<1x256xf32> to vector<8x256xf32>
    %166 = arith.mulf %164, %165 : vector<8x256xf32>
    %167 = vector.extract_strided_slice %156 {offsets = [0, 241], sizes = [8, 15], strides = [1, 1]} : vector<8x256xf32> to vector<8x15xf32>
    %168 = vector.extract_strided_slice %156 {offsets = [0, 0], sizes = [8, 241], strides = [1, 1]} : vector<8x256xf32> to vector<8x241xf32>
    %169 = tpu.concatenate %167, %168 in 1 : vector<8x15xf32>, vector<8x241xf32> -> vector<8x256xf32>
    %170 = vector.broadcast %3 : vector<1x256xf32> to vector<8x256xf32>
    %171 = arith.mulf %169, %170 : vector<8x256xf32>
    %172 = vector.extract_strided_slice %156 {offsets = [0, 255], sizes = [8, 1], strides = [1, 1]} : vector<8x256xf32> to vector<8x1xf32>
    %173 = vector.extract_strided_slice %156 {offsets = [0, 0], sizes = [8, 255], strides = [1, 1]} : vector<8x256xf32> to vector<8x255xf32>
    %174 = tpu.concatenate %172, %173 in 1 : vector<8x1xf32>, vector<8x255xf32> -> vector<8x256xf32>
    %175 = vector.broadcast %4 : vector<1x256xf32> to vector<8x256xf32>
    %176 = arith.mulf %174, %175 : vector<8x256xf32>
    %177 = vector.broadcast %5 : vector<1x256xf32> to vector<8x256xf32>
    %178 = arith.mulf %156, %177 : vector<8x256xf32>
    %179 = vector.extract_strided_slice %156 {offsets = [0, 1], sizes = [8, 255], strides = [1, 1]} : vector<8x256xf32> to vector<8x255xf32>
    %180 = vector.extract_strided_slice %156 {offsets = [0, 0], sizes = [8, 1], strides = [1, 1]} : vector<8x256xf32> to vector<8x1xf32>
    %181 = tpu.concatenate %179, %180 in 1 : vector<8x255xf32>, vector<8x1xf32> -> vector<8x256xf32>
    %182 = vector.broadcast %6 : vector<1x256xf32> to vector<8x256xf32>
    %183 = arith.mulf %181, %182 : vector<8x256xf32>
    %184 = vector.extract_strided_slice %156 {offsets = [0, 15], sizes = [8, 241], strides = [1, 1]} : vector<8x256xf32> to vector<8x241xf32>
    %185 = vector.extract_strided_slice %156 {offsets = [0, 0], sizes = [8, 15], strides = [1, 1]} : vector<8x256xf32> to vector<8x15xf32>
    %186 = tpu.concatenate %184, %185 in 1 : vector<8x241xf32>, vector<8x15xf32> -> vector<8x256xf32>
    %187 = vector.broadcast %7 : vector<1x256xf32> to vector<8x256xf32>
    %188 = arith.mulf %186, %187 : vector<8x256xf32>
    %189 = vector.extract_strided_slice %156 {offsets = [0, 16], sizes = [8, 240], strides = [1, 1]} : vector<8x256xf32> to vector<8x240xf32>
    %190 = vector.extract_strided_slice %156 {offsets = [0, 0], sizes = [8, 16], strides = [1, 1]} : vector<8x256xf32> to vector<8x16xf32>
    %191 = tpu.concatenate %189, %190 in 1 : vector<8x240xf32>, vector<8x16xf32> -> vector<8x256xf32>
    %192 = vector.broadcast %8 : vector<1x256xf32> to vector<8x256xf32>
    %193 = arith.mulf %191, %192 : vector<8x256xf32>
    %194 = vector.extract_strided_slice %156 {offsets = [0, 17], sizes = [8, 239], strides = [1, 1]} : vector<8x256xf32> to vector<8x239xf32>
    %195 = vector.extract_strided_slice %156 {offsets = [0, 0], sizes = [8, 17], strides = [1, 1]} : vector<8x256xf32> to vector<8x17xf32>
    %196 = tpu.concatenate %194, %195 in 1 : vector<8x239xf32>, vector<8x17xf32> -> vector<8x256xf32>
    %197 = vector.broadcast %9 : vector<1x256xf32> to vector<8x256xf32>
    %198 = arith.mulf %196, %197 : vector<8x256xf32>
    %199 = tpu.concatenate %161, %166, %171, %176, %178, %183, %188, %193, %198 in 0 : vector<8x256xf32>, vector<8x256xf32>, vector<8x256xf32>, vector<8x256xf32>, vector<8x256xf32>, vector<8x256xf32>, vector<8x256xf32>, vector<8x256xf32>, vector<8x256xf32> -> vector<72x256xf32>
    %cst_29 = arith.constant dense<0.000000e+00> : vector<8x256xf32>
    %200 = tpu.matmul %11, %199, %cst_29 {dimension_numbers = #tpu.dot_dimension_numbers<[1], [0], [0], [1], [0, 0, 1, 1], [], []>} : vector<8x72xf32>, vector<72x256xf32>, vector<8x256xf32> -> vector<8x256xf32>
    %201 = vector.broadcast %17 : vector<8x1xf32> to vector<8x256xf32>
    %202 = arith.addf %200, %201 : vector<8x256xf32>
    %cst_30 = arith.constant dense<0.000000e+00> : vector<8xf32>
    %203 = vector.multi_reduction <add>, %202, %cst_30 [1] : vector<8x256xf32> to vector<8xf32>
    %204 = vector.shape_cast %203 : vector<8xf32> to vector<8x1xf32>
    %205 = arith.addf %146, %204 : vector<8x1xf32>
    %206 = arith.mulf %202, %202 : vector<8x256xf32>
    %cst_31 = arith.constant dense<0.000000e+00> : vector<8xf32>
    %207 = vector.multi_reduction <add>, %206, %cst_31 [1] : vector<8x256xf32> to vector<8xf32>
    %208 = vector.shape_cast %207 : vector<8xf32> to vector<8x1xf32>
    %209 = arith.addf %147, %208 : vector<8x1xf32>
    %210 = vector.broadcast %143 : vector<8x1xf32> to vector<8x256xf32>
    %211 = arith.mulf %124, %210 : vector<8x256xf32>
    %212 = vector.broadcast %145 : vector<8x1xf32> to vector<8x256xf32>
    %213 = arith.addf %211, %212 : vector<8x256xf32>
    %cst_32 = arith.constant 0.000000e+00 : f32
    %214 = vector.broadcast %cst_32 : f32 to vector<8x256xf32>
    %215 = arith.cmpf ogt, %213, %214 : vector<8x256xf32>
    %cst_33 = arith.constant 2.000000e-01 : f32
    %216 = vector.broadcast %cst_33 : f32 to vector<8x256xf32>
    %217 = arith.mulf %216, %213 : vector<8x256xf32>
    %218 = arith.select %215, %213, %217 : vector<8x256xi1>, vector<8x256xf32>
    %219 = vector.extract_strided_slice %218 {offsets = [0, 239], sizes = [8, 17], strides = [1, 1]} : vector<8x256xf32> to vector<8x17xf32>
    %220 = vector.extract_strided_slice %218 {offsets = [0, 0], sizes = [8, 239], strides = [1, 1]} : vector<8x256xf32> to vector<8x239xf32>
    %221 = tpu.concatenate %219, %220 in 1 : vector<8x17xf32>, vector<8x239xf32> -> vector<8x256xf32>
    %222 = vector.broadcast %1 : vector<1x256xf32> to vector<8x256xf32>
    %223 = arith.mulf %221, %222 : vector<8x256xf32>
    %224 = vector.extract_strided_slice %218 {offsets = [0, 240], sizes = [8, 16], strides = [1, 1]} : vector<8x256xf32> to vector<8x16xf32>
    %225 = vector.extract_strided_slice %218 {offsets = [0, 0], sizes = [8, 240], strides = [1, 1]} : vector<8x256xf32> to vector<8x240xf32>
    %226 = tpu.concatenate %224, %225 in 1 : vector<8x16xf32>, vector<8x240xf32> -> vector<8x256xf32>
    %227 = vector.broadcast %2 : vector<1x256xf32> to vector<8x256xf32>
    %228 = arith.mulf %226, %227 : vector<8x256xf32>
    %229 = vector.extract_strided_slice %218 {offsets = [0, 241], sizes = [8, 15], strides = [1, 1]} : vector<8x256xf32> to vector<8x15xf32>
    %230 = vector.extract_strided_slice %218 {offsets = [0, 0], sizes = [8, 241], strides = [1, 1]} : vector<8x256xf32> to vector<8x241xf32>
    %231 = tpu.concatenate %229, %230 in 1 : vector<8x15xf32>, vector<8x241xf32> -> vector<8x256xf32>
    %232 = vector.broadcast %3 : vector<1x256xf32> to vector<8x256xf32>
    %233 = arith.mulf %231, %232 : vector<8x256xf32>
    %234 = vector.extract_strided_slice %218 {offsets = [0, 255], sizes = [8, 1], strides = [1, 1]} : vector<8x256xf32> to vector<8x1xf32>
    %235 = vector.extract_strided_slice %218 {offsets = [0, 0], sizes = [8, 255], strides = [1, 1]} : vector<8x256xf32> to vector<8x255xf32>
    %236 = tpu.concatenate %234, %235 in 1 : vector<8x1xf32>, vector<8x255xf32> -> vector<8x256xf32>
    %237 = vector.broadcast %4 : vector<1x256xf32> to vector<8x256xf32>
    %238 = arith.mulf %236, %237 : vector<8x256xf32>
    %239 = vector.broadcast %5 : vector<1x256xf32> to vector<8x256xf32>
    %240 = arith.mulf %218, %239 : vector<8x256xf32>
    %241 = vector.extract_strided_slice %218 {offsets = [0, 1], sizes = [8, 255], strides = [1, 1]} : vector<8x256xf32> to vector<8x255xf32>
    %242 = vector.extract_strided_slice %218 {offsets = [0, 0], sizes = [8, 1], strides = [1, 1]} : vector<8x256xf32> to vector<8x1xf32>
    %243 = tpu.concatenate %241, %242 in 1 : vector<8x255xf32>, vector<8x1xf32> -> vector<8x256xf32>
    %244 = vector.broadcast %6 : vector<1x256xf32> to vector<8x256xf32>
    %245 = arith.mulf %243, %244 : vector<8x256xf32>
    %246 = vector.extract_strided_slice %218 {offsets = [0, 15], sizes = [8, 241], strides = [1, 1]} : vector<8x256xf32> to vector<8x241xf32>
    %247 = vector.extract_strided_slice %218 {offsets = [0, 0], sizes = [8, 15], strides = [1, 1]} : vector<8x256xf32> to vector<8x15xf32>
    %248 = tpu.concatenate %246, %247 in 1 : vector<8x241xf32>, vector<8x15xf32> -> vector<8x256xf32>
    %249 = vector.broadcast %7 : vector<1x256xf32> to vector<8x256xf32>
    %250 = arith.mulf %248, %249 : vector<8x256xf32>
    %251 = vector.extract_strided_slice %218 {offsets = [0, 16], sizes = [8, 240], strides = [1, 1]} : vector<8x256xf32> to vector<8x240xf32>
    %252 = vector.extract_strided_slice %218 {offsets = [0, 0], sizes = [8, 16], strides = [1, 1]} : vector<8x256xf32> to vector<8x16xf32>
    %253 = tpu.concatenate %251, %252 in 1 : vector<8x240xf32>, vector<8x16xf32> -> vector<8x256xf32>
    %254 = vector.broadcast %8 : vector<1x256xf32> to vector<8x256xf32>
    %255 = arith.mulf %253, %254 : vector<8x256xf32>
    %256 = vector.extract_strided_slice %218 {offsets = [0, 17], sizes = [8, 239], strides = [1, 1]} : vector<8x256xf32> to vector<8x239xf32>
    %257 = vector.extract_strided_slice %218 {offsets = [0, 0], sizes = [8, 17], strides = [1, 1]} : vector<8x256xf32> to vector<8x17xf32>
    %258 = tpu.concatenate %256, %257 in 1 : vector<8x239xf32>, vector<8x17xf32> -> vector<8x256xf32>
    %259 = vector.broadcast %9 : vector<1x256xf32> to vector<8x256xf32>
    %260 = arith.mulf %258, %259 : vector<8x256xf32>
    %261 = tpu.concatenate %223, %228, %233, %238, %240, %245, %250, %255, %260 in 0 : vector<8x256xf32>, vector<8x256xf32>, vector<8x256xf32>, vector<8x256xf32>, vector<8x256xf32>, vector<8x256xf32>, vector<8x256xf32>, vector<8x256xf32>, vector<8x256xf32> -> vector<72x256xf32>
    %cst_34 = arith.constant dense<0.000000e+00> : vector<8x256xf32>
    %262 = tpu.matmul %11, %261, %cst_34 {dimension_numbers = #tpu.dot_dimension_numbers<[1], [0], [0], [1], [0, 0, 1, 1], [], []>} : vector<8x72xf32>, vector<72x256xf32>, vector<8x256xf32> -> vector<8x256xf32>
    %263 = vector.broadcast %17 : vector<8x1xf32> to vector<8x256xf32>
    %264 = arith.addf %262, %263 : vector<8x256xf32>
    %cst_35 = arith.constant dense<0.000000e+00> : vector<8xf32>
    %265 = vector.multi_reduction <add>, %264, %cst_35 [1] : vector<8x256xf32> to vector<8xf32>
    %266 = vector.shape_cast %265 : vector<8xf32> to vector<8x1xf32>
    %267 = arith.addf %205, %266 : vector<8x1xf32>
    %268 = arith.mulf %264, %264 : vector<8x256xf32>
    %cst_36 = arith.constant dense<0.000000e+00> : vector<8xf32>
    %269 = vector.multi_reduction <add>, %268, %cst_36 [1] : vector<8x256xf32> to vector<8xf32>
    %270 = vector.shape_cast %269 : vector<8xf32> to vector<8x1xf32>
    %271 = arith.addf %209, %270 : vector<8x1xf32>
    %cst_37 = arith.constant 0.001953125 : f32
    %272 = vector.broadcast %cst_37 : f32 to vector<8x1xf32>
    %273 = arith.mulf %267, %272 : vector<8x1xf32>
    %cst_38 = arith.constant 0.001953125 : f32
    %274 = vector.broadcast %cst_38 : f32 to vector<8x1xf32>
    %275 = arith.mulf %271, %274 : vector<8x1xf32>
    %276 = arith.mulf %273, %273 : vector<8x1xf32>
    %277 = arith.subf %275, %276 : vector<8x1xf32>
    %cst_39 = arith.constant 0.000000e+00 : f32
    %278 = vector.broadcast %cst_39 : f32 to vector<8x1xf32>
    %279 = arith.maximumf %277, %278 : vector<8x1xf32>
    %cst_40 = arith.constant 9.99999974E-6 : f32
    %280 = vector.broadcast %cst_40 : f32 to vector<8x1xf32>
    %281 = arith.addf %279, %280 : vector<8x1xf32>
    %282 = math.rsqrt %281 : vector<8x1xf32>
    %283 = arith.mulf %18, %282 : vector<8x1xf32>
    %284 = arith.mulf %273, %283 : vector<8x1xf32>
    %285 = arith.subf %19, %284 : vector<8x1xf32>
    %286 = vector.broadcast %283 : vector<8x1xf32> to vector<8x256xf32>
    %287 = arith.mulf %202, %286 : vector<8x256xf32>
    %288 = vector.broadcast %285 : vector<8x1xf32> to vector<8x256xf32>
    %289 = arith.addf %287, %288 : vector<8x256xf32>
    %cst_41 = arith.constant 0.000000e+00 : f32
    %290 = vector.broadcast %cst_41 : f32 to vector<8x256xf32>
    %291 = arith.cmpf ogt, %289, %290 : vector<8x256xf32>
    %cst_42 = arith.constant 2.000000e-01 : f32
    %292 = vector.broadcast %cst_42 : f32 to vector<8x256xf32>
    %293 = arith.mulf %292, %289 : vector<8x256xf32>
    %294 = arith.select %291, %289, %293 : vector<8x256xi1>, vector<8x256xf32>
    %c0_43 = arith.constant 0 : index
    %c0_44 = arith.constant 0 : index
    %c0_45 = arith.constant 0 : index
    %295 = vector.load %arg7[%c0_43, %c0_44, %c0_45] : memref<2x8x256xf32, #tpu.memory_space<vmem>>, vector<1x8x256xf32>
    %296 = vector.shape_cast %295 : vector<1x8x256xf32> to vector<8x256xf32>
    %297 = vector.shape_cast %294 : vector<8x256xf32> to vector<1x8x256xf32>
    tpu.vector_store %arg7[%c0_43, %c0_44, %c0_45], %297 {strides = array<i32>} : memref<2x8x256xf32, #tpu.memory_space<vmem>>, vector<1x8x256xf32>,
    %298 = vector.broadcast %283 : vector<8x1xf32> to vector<8x256xf32>
    %299 = arith.mulf %264, %298 : vector<8x256xf32>
    %300 = vector.broadcast %285 : vector<8x1xf32> to vector<8x256xf32>
    %301 = arith.addf %299, %300 : vector<8x256xf32>
    %cst_46 = arith.constant 0.000000e+00 : f32
    %302 = vector.broadcast %cst_46 : f32 to vector<8x256xf32>
    %303 = arith.cmpf ogt, %301, %302 : vector<8x256xf32>
    %cst_47 = arith.constant 2.000000e-01 : f32
    %304 = vector.broadcast %cst_47 : f32 to vector<8x256xf32>
    %305 = arith.mulf %304, %301 : vector<8x256xf32>
    %306 = arith.select %303, %301, %305 : vector<8x256xi1>, vector<8x256xf32>
    %c1_48 = arith.constant 1 : index
    %c0_49 = arith.constant 0 : index
    %c0_50 = arith.constant 0 : index
    %307 = vector.load %arg7[%c1_48, %c0_49, %c0_50] : memref<2x8x256xf32, #tpu.memory_space<vmem>>, vector<1x8x256xf32>
    %308 = vector.shape_cast %307 : vector<1x8x256xf32> to vector<8x256xf32>
    %309 = vector.shape_cast %306 : vector<8x256xf32> to vector<1x8x256xf32>
    tpu.vector_store %arg7[%c1_48, %c0_49, %c0_50], %309 {strides = array<i32>} : memref<2x8x256xf32, #tpu.memory_space<vmem>>, vector<1x8x256xf32>,
    return
  }
  func.func @transform_0(%arg0: i32) -> (i32, i32, i32) {
    %c0_i32 = arith.constant 0 : i32
    %c0_i32_0 = arith.constant 0 : i32
    %c0_i32_1 = arith.constant 0 : i32
    %c0_i32_2 = arith.constant 0 : i32
    return %c0_i32, %c0_i32_0, %c0_i32_1 : i32, i32, i32
  }
  func.func @transform_1(%arg0: i32) -> (i32, i32) {
    %c0_i32 = arith.constant 0 : i32
    %c0_i32_0 = arith.constant 0 : i32
    %c0_i32_1 = arith.constant 0 : i32
    return %c0_i32, %c0_i32_0 : i32, i32
  }
  func.func @transform_2(%arg0: i32) -> (i32, i32) {
    %c0_i32 = arith.constant 0 : i32
    %c0_i32_0 = arith.constant 0 : i32
    %c0_i32_1 = arith.constant 0 : i32
    return %c0_i32, %c0_i32_0 : i32, i32
  }
  func.func @transform_3(%arg0: i32) -> (i32, i32) {
    %c0_i32 = arith.constant 0 : i32
    %c0_i32_0 = arith.constant 0 : i32
    %c0_i32_1 = arith.constant 0 : i32
    return %c0_i32, %c0_i32_0 : i32, i32
  }
  func.func @transform_4(%arg0: i32) -> (i32, i32) {
    %c0_i32 = arith.constant 0 : i32
    %c0_i32_0 = arith.constant 0 : i32
    %c0_i32_1 = arith.constant 0 : i32
    return %c0_i32, %c0_i32_0 : i32, i32
  }
  func.func @transform_5(%arg0: i32) -> (i32, i32) {
    %c0_i32 = arith.constant 0 : i32
    %c0_i32_0 = arith.constant 0 : i32
    %c0_i32_1 = arith.constant 0 : i32
    return %c0_i32, %c0_i32_0 : i32, i32
  }
  func.func @transform_6(%arg0: i32) -> (i32, i32, i32) {
    %c0_i32 = arith.constant 0 : i32
    %c0_i32_0 = arith.constant 0 : i32
    %c0_i32_1 = arith.constant 0 : i32
    %c0_i32_2 = arith.constant 0 : i32
    return %c0_i32, %c0_i32_0, %c0_i32_1 : i32, i32, i32
  }
}

</mosaic_0001>

<llo_original>
// kernel: double_conv.1
$region0: #{double_conv.1}
  #allocation0 [shape = 'u32[]', space=smem, size = 0x4, offset = 0x4, fixed_abs, tag = 'smem constant byte address 0x4 - core index']
  #allocation1 [shape = 'u32[144,128]{1,0:T(1,128)}', space=vmem, size = 0x12000, scoped, tag = 'internal scratch']
  %s0 = inlined_call_operand.vmem [shape: f32[2,4,256], index: 0, kind: input, shape index: {}]
  %s1 = inlined_call_operand.vmem [shape: f32[9,256], index: 1, kind: input, shape index: {}]
  %s2 = inlined_call_operand.vmem [shape: f32[8,36], index: 2, kind: input, shape index: {}]
  %s3 = inlined_call_operand.vmem [shape: f32[8,3], index: 3, kind: input, shape index: {}]
  %s4 = inlined_call_operand.vmem [shape: f32[8,72], index: 4, kind: input, shape index: {}]
  %s5 = inlined_call_operand.vmem [shape: f32[8,3], index: 5, kind: input, shape index: {}]
  %s6 = inlined_call_operand.vmem [shape: f32[2,8,256], index: 6, kind: output, shape index: {}]
  %s7 = sld [smem:[#allocation0]]
  $region34: #{double_conv.1} parent=0
    _
  %s9 = ssub.s32 1, %s7
  %s10 = scalar_select 0, %s9, %s7
  // Predicated region
  $region2: #{double_conv.1} parent=0 // pred_check
    _
  $region3: #{double_conv.1} parent=0 // pred_check_branch
    %12 = sbr.rel (0) target = $region5
  $region4: #{double_conv.1} parent=0 // pred_region
    _
  $region5: #{double_conv.1} parent=0 // pred_fallthru
    _
  // Predicated region
  $region6: #{double_conv.1} parent=0 // pred_check
    _
  $region7: #{double_conv.1} parent=0 // pred_check_branch
    %14 = sbr.rel (0) target = $region9
  $region8: #{double_conv.1} parent=0 // pred_region
    _
  $region9: #{double_conv.1} parent=0 // pred_fallthru
    _
  // Predicated region
  $region10: #{double_conv.1} parent=0 // pred_check
    _
  $region11: #{double_conv.1} parent=0 // pred_check_branch
    %16 = sbr.rel (0) target = $region13
  $region12: #{double_conv.1} parent=0 // pred_region
    _
  $region13: #{double_conv.1} parent=0 // pred_fallthru
    _
  // Predicated region
  $region14: #{double_conv.1} parent=0 // pred_check
    _
  $region15: #{double_conv.1} parent=0 // pred_check_branch
    %18 = sbr.rel (0) target = $region17
  $region16: #{double_conv.1} parent=0 // pred_region
    _
  $region17: #{double_conv.1} parent=0 // pred_fallthru
    _
  // Predicated region
  $region18: #{double_conv.1} parent=0 // pred_check
    _
  $region19: #{double_conv.1} parent=0 // pred_check_branch
    %20 = sbr.rel (0) target = $region21
  $region20: #{double_conv.1} parent=0 // pred_region
    _
  $region21: #{double_conv.1} parent=0 // pred_fallthru
    _
  // Predicated region
  $region22: #{double_conv.1} parent=0 // pred_check
    _
  $region23: #{double_conv.1} parent=0 // pred_check_branch
    %22 = sbr.rel (0) target = $region25
  $region24: #{double_conv.1} parent=0 // pred_region
    _
  $region25: #{double_conv.1} parent=0 // pred_fallthru
    _
  %v23 = vld [vmem:[%s1] sm:$0xff]
  %v24 = vld [vmem:[%s1 + $0x8] sm:$0xff]
  %v25 = vld [vmem:[%s1 + $0x10] sm:$0x1]
  %v26 = vld [vmem:[%s1 + $0x18] sm:$0x1]
  %v27 = vld [vmem:[%s2] sm:$0xff]
  %v28 = vld [vmem:[%s4] sm:$0xff]
  %v29 = vld [vmem:[%s3] sm:$0xff]
  %v30 = vld [vmem:[%s5] sm:$0xff]
  %v31 = vld [vmem:[%s0] sm:$0xff]
  %v33 = vcombine.high %v31, %v31
  %34 = vrot.lane.b32.xlu0 %v33, 17
  %v35 = vpop.permute.xlu0 %34
  %37 = vrot.lane.b32.xlu0 %v31, 17
  %v38 = vpop.permute.xlu0 %37
  %vm39 = vcmask 138240
  %v40 = vsel %vm39, %v38, %v35
  %v43 = vsel %vm39, %v35, %v38
  %v44 = vlaneseq
  %v45 = vshrl.u32 %v44, 7
  %v46 = vsub.s32 0, %v45
  %v47 = vrot.slane %v23, %v46
  %v48 = vlaneseq
  %v49 = vshrl.u32 %v48, 7
  %v50 = vsub.s32 0, %v49
  %v51 = vrot.slane %v24, %v50
  %v52 = vmul.f32 %v43, %v47
  %v53 = vmul.f32 %v40, %v51
  %54 = vrot.lane.b32.xlu0 %v33, 16
  %v55 = vpop.permute.xlu0 %54
  %57 = vrot.lane.b32.xlu0 %v31, 16
  %v58 = vpop.permute.xlu0 %57
  %vm59 = vcmask 130048
  %v60 = vsel %vm59, %v58, %v55
  %v63 = vsel %vm59, %v55, %v58
  %v64 = vlaneseq
  %v65 = vshrl.u32 %v64, 7
  %v66 = vsub.s32 1, %v65
  %v67 = vrot.slane %v23, %v66
  %v68 = vlaneseq
  %v69 = vshrl.u32 %v68, 7
  %v70 = vsub.s32 1, %v69
  %v71 = vrot.slane %v24, %v70
  %v72 = vmul.f32 %v63, %v67
  %v73 = vmul.f32 %v60, %v71
  %74 = vrot.lane.b32.xlu0 %v33, 15
  %v75 = vpop.permute.xlu0 %74
  %77 = vrot.lane.b32.xlu0 %v31, 15
  %v78 = vpop.permute.xlu0 %77
  %vm79 = vcmask 121856
  %v80 = vsel %vm79, %v78, %v75
  %v83 = vsel %vm79, %v75, %v78
  %v84 = vlaneseq
  %v85 = vshrl.u32 %v84, 7
  %v86 = vsub.s32 2, %v85
  %v87 = vrot.slane %v23, %v86
  %v88 = vlaneseq
  %v89 = vshrl.u32 %v88, 7
  %v90 = vsub.s32 2, %v89
  %v91 = vrot.slane %v24, %v90
  %v92 = vmul.f32 %v83, %v87
  %v93 = vmul.f32 %v80, %v91
  %94 = vrot.lane.b32.xlu0 %v33, 1
  %v95 = vpop.permute.xlu0 %94
  %97 = vrot.lane.b32.xlu0 %v31, 1
  %v98 = vpop.permute.xlu0 %97
  %vm99 = vcmask 7168
  %v100 = vsel %vm99, %v98, %v95
  %v103 = vsel %vm99, %v95, %v98
  %v104 = vlaneseq
  %v105 = vshrl.u32 %v104, 7
  %v106 = vsub.s32 3, %v105
  %v107 = vrot.slane %v23, %v106
  %v108 = vlaneseq
  %v109 = vshrl.u32 %v108, 7
  %v110 = vsub.s32 3, %v109
  %v111 = vrot.slane %v24, %v110
  %v112 = vmul.f32 %v103, %v107
  %v113 = vmul.f32 %v100, %v111
  %v114 = vlaneseq
  %v115 = vshrl.u32 %v114, 7
  %v116 = vsub.s32 4, %v115
  %v117 = vrot.slane %v23, %v116
  %v118 = vlaneseq
  %v119 = vshrl.u32 %v118, 7
  %v120 = vsub.s32 4, %v119
  %v121 = vrot.slane %v24, %v120
  %v124 = vcombine.low %v117, %v121
  %v126 = vmul.f32 %v31, %v124
  %127 = vrot.lane.b32.xlu0 %v31, 127
  %v128 = vpop.permute.xlu0 %127
  %129 = vrot.lane.b32.xlu0 %v33, 127
  %v130 = vpop.permute.xlu0 %129
  %vm131 = vcmask 1039360
  %v132 = vsel %vm131, %v128, %v130
  %v136 = vsel %vm131, %v130, %v128
  %v137 = vlaneseq
  %v138 = vshrl.u32 %v137, 7
  %v139 = vsub.s32 5, %v138
  %v140 = vrot.slane %v23, %v139
  %v141 = vlaneseq
  %v142 = vshrl.u32 %v141, 7
  %v143 = vsub.s32 5, %v142
  %v144 = vrot.slane %v24, %v143
  %v145 = vmul.f32 %v132, %v140
  %v146 = vmul.f32 %v136, %v144
  %147 = vrot.lane.b32.xlu0 %v31, 113
  %v148 = vpop.permute.xlu0 %147
  %149 = vrot.lane.b32.xlu0 %v33, 113
  %v150 = vpop.permute.xlu0 %149
  %vm151 = vcmask 924672
  %v152 = vsel %vm151, %v148, %v150
  %v156 = vsel %vm151, %v150, %v148
  %v157 = vlaneseq
  %v158 = vshrl.u32 %v157, 7
  %v159 = vsub.s32 6, %v158
  %v160 = vrot.slane %v23, %v159
  %v161 = vlaneseq
  %v162 = vshrl.u32 %v161, 7
  %v163 = vsub.s32 6, %v162
  %v164 = vrot.slane %v24, %v163
  %v165 = vmul.f32 %v152, %v160
  %v166 = vmul.f32 %v156, %v164
  %167 = vrot.lane.b32.xlu0 %v31, 112
  %v168 = vpop.permute.xlu0 %167
  %169 = vrot.lane.b32.xlu0 %v33, 112
  %v170 = vpop.permute.xlu0 %169
  %vm171 = vcmask 916480
  %v172 = vsel %vm171, %v168, %v170
  %v176 = vsel %vm171, %v170, %v168
  %v177 = vlaneseq
  %v178 = vshrl.u32 %v177, 7
  %v179 = vsub.s32 7, %v178
  %v180 = vrot.slane %v23, %v179
  %v181 = vlaneseq
  %v182 = vshrl.u32 %v181, 7
  %v183 = vsub.s32 7, %v182
  %v184 = vrot.slane %v24, %v183
  %v185 = vmul.f32 %v172, %v180
  %v186 = vmul.f32 %v176, %v184
  %187 = vrot.lane.b32.xlu0 %v31, 111
  %v188 = vpop.permute.xlu0 %187
  %189 = vrot.lane.b32.xlu0 %v33, 111
  %v190 = vpop.permute.xlu0 %189
  %vm191 = vcmask 908288
  %v192 = vsel %vm191, %v188, %v190
  %v196 = vsel %vm191, %v190, %v188
  %v197 = vlaneseq
  %v198 = vshrl.u32 %v197, 7
  %v199 = vsub.s32 0, %v198
  %v200 = vrot.slane %v25, %v199
  %v201 = vlaneseq
  %v202 = vshrl.u32 %v201, 7
  %v203 = vsub.s32 0, %v202
  %v204 = vrot.slane %v26, %v203
  %v205 = vmul.f32 %v192, %v200
  %v206 = vmul.f32 %v196, %v204
  %v209 = vrot.slane %v72, 4
  %v210 = vrot.slane %v73, 4
  %v215 = vrot.slane %v112, 4
  %v216 = vrot.slane %v113, 4
  %v220 = vcombine.high %v126, %v126
  %v224 = vrot.slane %v145, 4
  %v225 = vrot.slane %v146, 4
  %v230 = vrot.slane %v185, 4
  %v231 = vrot.slane %v186, 4
  %vm234 = vcmask 1043456
  %v235 = vsel %vm234, %v52, %v209
  %v236 = vsel %vm234, %v53, %v210
  %v237 = vsel %vm234, %v92, %v215
  %v238 = vsel %vm234, %v93, %v216
  %v239 = vsel %vm234, %v126, %v224
  %v240 = vsel %vm234, %v220, %v225
  %v241 = vsel %vm234, %v165, %v230
  %v242 = vsel %vm234, %v166, %v231
  %244 = vset.pattern.permute.xlu0 0
  %245 = vperm.xlu0 %244, %v29
  %v246 = vpop.permute.xlu0 %245
  %vm248 = vcmask 293888
  %v250 = vsel %vm248, %v27, 0
  %v253 = vsel %vm234, %v205, 0
  %v256 = vsel %vm234, %v206, 0
  %258 = vmatprep.subr.mxu0 %v236
  %259 = vmatpush1.msra.mxu0 %v235
  %260 = vmatprep.subr.mxu0 %v238
  %261 = vmatpush1.msra.mxu0 %v237
  %262 = vmatprep.subr.mxu0 %v240
  %263 = vmatpush1.msra.mxu0 %v239
  %264 = vmatprep.subr.mxu0 %v242
  %265 = vmatpush1.msra.mxu0 %v241
  %266 = vmatprep.subr.mxu0 %v256
  %267 = vmatpush1.msra.mxu0 %v253
  %268 = vmatprep.subr.mxu0 0.0
  %269 = vmatpush1.msra.mxu0 0.0
  %270 = vmatprep.subr.mxu0 0.0
  %271 = vmatpush1.msra.mxu0 0.0
  %272 = vmatprep.subr.mxu0 0.0
  %273 = vmatpush1.msra.mxu0 0.0
  %274 = vmatprep.subr.mxu0 0.0
  %275 = vmatpush1.msra.mxu0 0.0
  %276 = vmatprep.subr.mxu0 0.0
  %277 = vmatpush1.msra.mxu0 0.0
  %278 = vmatprep.subr.mxu0 0.0
  %279 = vmatpush1.msra.mxu0 0.0
  %280 = vmatprep.subr.mxu0 0.0
  %281 = vmatpush1.msra.mxu0 0.0
  %282 = vmatprep.subr.mxu0 0.0
  %283 = vmatpush1.msra.mxu0 0.0
  %284 = vmatprep.subr.mxu0 0.0
  %285 = vmatpush1.msra.mxu0 0.0
  %286 = vmatprep.subr.mxu0 0.0
  %287 = vmatpush1.msra.mxu0 0.0
  %288 = vmatprep.subr.mxu0 0.0
  %289 = vmatpush1.msra.mxu0 0.0
  %290 = vmatprep.subr.mxu0 0.0
  %291 = vmatpush1.msra.mxu0 0.0
  %292 = vmatprep.subr.mxu0 0.0
  %293 = vmatpush1.msra.mxu0 0.0
  %294 = vmatprep.subr.mxu0 0.0
  %295 = vmatpush1.msra.mxu0 0.0
  %296 = vmatprep.subr.mxu0 0.0
  %297 = vmatpush1.msra.mxu0 0.0
  %298 = vmatprep.subr.mxu0 0.0
  %299 = vmatpush1.msra.mxu0 0.0
  %300 = vmatprep.subr.mxu0 0.0
  %301 = vmatpush1.msra.mxu0 0.0
  %302 = vmatprep.subr.mxu0 0.0
  %303 = vmatpush1.msra.mxu0 0.0
  %304 = vmatprep.subr.mxu0 0.0
  %305 = vmatpush1.msra.mxu0 0.0
  %306 = vmatprep.subr.mxu0 0.0
  %307 = vmatpush1.msra.mxu0 0.0
  %308 = vmatprep.subr.mxu0 0.0
  %309 = vmatpush1.msra.mxu0 0.0
  %310 = vmatprep.subr.mxu0 0.0
  %311 = vmatpush1.msra.mxu0 0.0
  %312 = vmatprep.subr.mxu0 0.0
  %313 = vmatpush1.msra.mxu0 0.0
  %314 = vmatprep.subr.mxu0 0.0
  %315 = vmatpush1.msra.mxu0 0.0
  %316 = vmatprep.subr.mxu0 0.0
  %317 = vmatpush1.msra.mxu0 0.0
  %318 = vmatprep.subr.mxu0 0.0
  %319 = vmatpush1.msra.mxu0 0.0
  %320 = vmatprep.subr.mxu0 0.0
  %321 = vmatpush1.msra.mxu0 0.0
  %322 = vmatprep.mubr.f32.mxu0 0.0
  %323 = vmatmul.mubr.f32.gmra.mrb[0].mxu0 %v250
  %v324 = vpop.f32.mrb[0].mxu0
  %v325 = vadd.f32 %v246, %v324
  %v326 = vpop.f32.mrb[0].mxu0
  %v327 = vadd.f32 %v246, %v326
  %328 = vdwg.mxu0
  %v329 = vadd.f32 %v325, %v327
  %330 = vadd.xlane.f32.xlu0 %v329
  %v331 = vpop.xlane.xlu0 %330
  %v332 = vadd.f32 %v331, 0.0
  %v333 = vmul.f32 %v325, %v325
  %v334 = vmul.f32 %v327, %v327
  %v335 = vadd.f32 %v333, %v334
  %336 = vadd.xlane.f32.xlu0 %v335
  %v337 = vpop.xlane.xlu0 %336
  %v338 = vadd.f32 %v337, 0.0
  %s339 = scalar_lea.vmem %s0, 8
  %v340 = vld [vmem:[%s339] sm:$0xff]
  %v342 = vcombine.high %v340, %v340
  %343 = vrot.lane.b32.xlu0 %v342, 17
  %v344 = vpop.permute.xlu0 %343
  %346 = vrot.lane.b32.xlu0 %v340, 17
  %v347 = vpop.permute.xlu0 %346
  %v348 = vsel %vm39, %v347, %v344
  %v351 = vsel %vm39, %v344, %v347
  %v352 = vmul.f32 %v351, %v47
  %v353 = vmul.f32 %v348, %v51
  %354 = vrot.lane.b32.xlu0 %v342, 16
  %v355 = vpop.permute.xlu0 %354
  %357 = vrot.lane.b32.xlu0 %v340, 16
  %v358 = vpop.permute.xlu0 %357
  %v359 = vsel %vm59, %v358, %v355
  %v362 = vsel %vm59, %v355, %v358
  %v363 = vmul.f32 %v362, %v67
  %v364 = vmul.f32 %v359, %v71
  %365 = vrot.lane.b32.xlu0 %v342, 15
  %v366 = vpop.permute.xlu0 %365
  %368 = vrot.lane.b32.xlu0 %v340, 15
  %v369 = vpop.permute.xlu0 %368
  %v370 = vsel %vm79, %v369, %v366
  %v373 = vsel %vm79, %v366, %v369
  %v374 = vmul.f32 %v373, %v87
  %v375 = vmul.f32 %v370, %v91
  %376 = vrot.lane.b32.xlu0 %v342, 1
  %v377 = vpop.permute.xlu0 %376
  %379 = vrot.lane.b32.xlu0 %v340, 1
  %v380 = vpop.permute.xlu0 %379
  %v381 = vsel %vm99, %v380, %v377
  %v384 = vsel %vm99, %v377, %v380
  %v385 = vmul.f32 %v384, %v107
  %v386 = vmul.f32 %v381, %v111
  %v387 = vmul.f32 %v340, %v124
  %388 = vrot.lane.b32.xlu0 %v340, 127
  %v389 = vpop.permute.xlu0 %388
  %390 = vrot.lane.b32.xlu0 %v342, 127
  %v391 = vpop.permute.xlu0 %390
  %v392 = vsel %vm131, %v389, %v391
  %v396 = vsel %vm131, %v391, %v389
  %v397 = vmul.f32 %v392, %v140
  %v398 = vmul.f32 %v396, %v144
  %399 = vrot.lane.b32.xlu0 %v340, 113
  %v400 = vpop.permute.xlu0 %399
  %401 = vrot.lane.b32.xlu0 %v342, 113
  %v402 = vpop.permute.xlu0 %401
  %v403 = vsel %vm151, %v400, %v402
  %v407 = vsel %vm151, %v402, %v400
  %v408 = vmul.f32 %v403, %v160
  %v409 = vmul.f32 %v407, %v164
  %410 = vrot.lane.b32.xlu0 %v340, 112
  %v411 = vpop.permute.xlu0 %410
  %412 = vrot.lane.b32.xlu0 %v342, 112
  %v413 = vpop.permute.xlu0 %412
  %v414 = vsel %vm171, %v411, %v413
  %v418 = vsel %vm171, %v413, %v411
  %v419 = vmul.f32 %v414, %v180
  %v420 = vmul.f32 %v418, %v184
  %421 = vrot.lane.b32.xlu0 %v340, 111
  %v422 = vpop.permute.xlu0 %421
  %423 = vrot.lane.b32.xlu0 %v342, 111
  %v424 = vpop.permute.xlu0 %423
  %v425 = vsel %vm191, %v422, %v424
  %v429 = vsel %vm191, %v424, %v422
  %v430 = vmul.f32 %v425, %v200
  %v431 = vmul.f32 %v429, %v204
  %v434 = vrot.slane %v363, 4
  %v435 = vrot.slane %v364, 4
  %v440 = vrot.slane %v385, 4
  %v441 = vrot.slane %v386, 4
  %v445 = vcombine.high %v387, %v387
  %v449 = vrot.slane %v397, 4
  %v450 = vrot.slane %v398, 4
  %v455 = vrot.slane %v419, 4
  %v456 = vrot.slane %v420, 4
  %v459 = vsel %vm234, %v352, %v434
  %v460 = vsel %vm234, %v353, %v435
  %v461 = vsel %vm234, %v374, %v440
  %v462 = vsel %vm234, %v375, %v441
  %v463 = vsel %vm234, %v387, %v449
  %v464 = vsel %vm234, %v445, %v450
  %v465 = vsel %vm234, %v408, %v455
  %v466 = vsel %vm234, %v409, %v456
  %v468 = vsel %vm234, %v430, 0
  %v471 = vsel %vm234, %v431, 0
  %473 = vmatprep.subr.mxu0 %v460
  %474 = vmatpush1.msra.mxu0 %v459
  %475 = vmatprep.subr.mxu0 %v462
  %476 = vmatpush1.msra.mxu0 %v461
  %477 = vmatprep.subr.mxu0 %v464
  %478 = vmatpush1.msra.mxu0 %v463
  %479 = vmatprep.subr.mxu0 %v466
  %480 = vmatpush1.msra.mxu0 %v465
  %481 = vmatprep.subr.mxu0 %v471
  %482 = vmatpush1.msra.mxu0 %v468
  %483 = vmatprep.subr.mxu0 0.0
  %484 = vmatpush1.msra.mxu0 0.0
  %485 = vmatprep.subr.mxu0 0.0
  %486 = vmatpush1.msra.mxu0 0.0
  %487 = vmatprep.subr.mxu0 0.0
  %488 = vmatpush1.msra.mxu0 0.0
  %489 = vmatprep.subr.mxu0 0.0
  %490 = vmatpush1.msra.mxu0 0.0
  %491 = vmatprep.subr.mxu0 0.0
  %492 = vmatpush1.msra.mxu0 0.0
  %493 = vmatprep.subr.mxu0 0.0
  %494 = vmatpush1.msra.mxu0 0.0
  %495 = vmatprep.subr.mxu0 0.0
  %496 = vmatpush1.msra.mxu0 0.0
  %497 = vmatprep.subr.mxu0 0.0
  %498 = vmatpush1.msra.mxu0 0.0
  %499 = vmatprep.subr.mxu0 0.0
  %500 = vmatpush1.msra.mxu0 0.0
  %501 = vmatprep.subr.mxu0 0.0
  %502 = vmatpush1.msra.mxu0 0.0
  %503 = vmatprep.subr.mxu0 0.0
  %504 = vmatpush1.msra.mxu0 0.0
  %505 = vmatprep.subr.mxu0 0.0
  %506 = vmatpush1.msra.mxu0 0.0
  %507 = vmatprep.subr.mxu0 0.0
  %508 = vmatpush1.msra.mxu0 0.0
  %509 = vmatprep.subr.mxu0 0.0
  %510 = vmatpush1.msra.mxu0 0.0
  %511 = vmatprep.subr.mxu0 0.0
  %512 = vmatpush1.msra.mxu0 0.0
  %513 = vmatprep.subr.mxu0 0.0
  %514 = vmatpush1.msra.mxu0 0.0
  %515 = vmatprep.subr.mxu0 0.0
  %516 = vmatpush1.msra.mxu0 0.0
  %517 = vmatprep.subr.mxu0 0.0
  %518 = vmatpush1.msra.mxu0 0.0
  %519 = vmatprep.subr.mxu0 0.0
  %520 = vmatpush1.msra.mxu0 0.0
  %521 = vmatprep.subr.mxu0 0.0
  %522 = vmatpush1.msra.mxu0 0.0
  %523 = vmatprep.subr.mxu0 0.0
  %524 = vmatpush1.msra.mxu0 0.0
  %525 = vmatprep.subr.mxu0 0.0
  %526 = vmatpush1.msra.mxu0 0.0
  %527 = vmatprep.subr.mxu0 0.0
  %528 = vmatpush1.msra.mxu0 0.0
  %529 = vmatprep.subr.mxu0 0.0
  %530 = vmatpush1.msra.mxu0 0.0
  %531 = vmatprep.subr.mxu0 0.0
  %532 = vmatpush1.msra.mxu0 0.0
  %533 = vmatprep.subr.mxu0 0.0
  %534 = vmatpush1.msra.mxu0 0.0
  %535 = vmatprep.subr.mxu0 0.0
  %536 = vmatpush1.msra.mxu0 0.0
  %537 = vmatprep.mubr.f32.mxu0 0.0
  %538 = vmatmul.mubr.f32.gmra.mrb[0].mxu0 %v250
  %v539 = vpop.f32.mrb[0].mxu0
  %v540 = vadd.f32 %v246, %v539
  %v541 = vpop.f32.mrb[0].mxu0
  %v542 = vadd.f32 %v246, %v541
  %543 = vdwg.mxu0
  %v544 = vadd.f32 %v540, %v542
  %545 = vadd.xlane.f32.xlu0 %v544
  %v546 = vpop.xlane.xlu0 %545
  %v547 = vadd.f32 %v332, %v546
  %v548 = vmul.f32 %v540, %v540
  %v549 = vmul.f32 %v542, %v542
  %v550 = vadd.f32 %v548, %v549
  %551 = vadd.xlane.f32.xlu0 %v550
  %v552 = vpop.xlane.xlu0 %551
  %v553 = vadd.f32 %v338, %v552
  %v554 = vmul.f32 %v547, 0.001953125
  %v555 = vmul.f32 %v553, 0.001953125
  %v556 = vmul.f32 %v554, %v554
  %v557 = vsub.f32 %v555, %v556
  %v558 = vmax.f32 %v557, 0.0
  %v559 = vadd.f32 %v558, 1e-05
  %v560 = vrsqrt.pop %v559
  %v561 = vmul.f32 %v29, %v560
  %v562 = vmul.f32 %v554, %v561
  %564 = vrot.lane.b32.xlu0 %v562, 1
  %v565 = vpop.permute.xlu0 %564
  %v567 = vsub.f32 %v29, %v565
  %569 = vset.pattern.permute.xlu0 1
  %570 = vperm.xlu0 %569, %v561
  %v571 = vpop.permute.xlu0 %570
  %v573 = vmul.f32 %v325, %v571
  %v574 = vmul.f32 %v327, %v571
  %576 = vset.pattern.permute.xlu0 2
  %577 = vperm.xlu0 %576, %v567
  %v578 = vpop.permute.xlu0 %577
  %v580 = vadd.f32 %v573, %v578
  %v581 = vadd.f32 %v574, %v578
  %vm582 = vcmp.gt.f32.partialorder %v580, 0.0
  %vm583 = vcmp.gt.f32.partialorder %v581, 0.0
  %v584 = vmul.f32 %v580, 0.2
  %v585 = vmul.f32 %v581, 0.2
  %v586 = vsel %vm582, %v580, %v584
  %v587 = vsel %vm583, %v581, %v585
  %589 = vrot.lane.b32.xlu0 %v587, 17
  %v590 = vpop.permute.xlu0 %589
  %593 = vrot.lane.b32.xlu0 %v586, 17
  %v594 = vpop.permute.xlu0 %593
  %v595 = vsel %vm39, %v594, %v590
  %v598 = vsel %vm39, %v590, %v594
  %v599 = vmul.f32 %v598, %v47
  %v600 = vmul.f32 %v595, %v51
  %601 = vrot.lane.b32.xlu0 %v587, 16
  %v602 = vpop.permute.xlu0 %601
  %604 = vrot.lane.b32.xlu0 %v586, 16
  %v605 = vpop.permute.xlu0 %604
  %v606 = vsel %vm59, %v605, %v602
  %v609 = vsel %vm59, %v602, %v605
  %v610 = vmul.f32 %v609, %v67
  %v611 = vmul.f32 %v606, %v71
  %612 = vrot.lane.b32.xlu0 %v587, 15
  %v613 = vpop.permute.xlu0 %612
  %615 = vrot.lane.b32.xlu0 %v586, 15
  %v616 = vpop.permute.xlu0 %615
  %v617 = vsel %vm79, %v616, %v613
  %v620 = vsel %vm79, %v613, %v616
  %v621 = vmul.f32 %v620, %v87
  %v622 = vmul.f32 %v617, %v91
  %623 = vrot.lane.b32.xlu0 %v587, 1
  %v624 = vpop.permute.xlu0 %623
  %626 = vrot.lane.b32.xlu0 %v586, 1
  %v627 = vpop.permute.xlu0 %626
  %v628 = vsel %vm99, %v627, %v624
  %v631 = vsel %vm99, %v624, %v627
  %v632 = vmul.f32 %v631, %v107
  %v633 = vmul.f32 %v628, %v111
  %v634 = vmul.f32 %v586, %v117
  %v635 = vmul.f32 %v587, %v121
  %636 = vrot.lane.b32.xlu0 %v586, 127
  %v637 = vpop.permute.xlu0 %636
  %638 = vrot.lane.b32.xlu0 %v587, 127
  %v639 = vpop.permute.xlu0 %638
  %v640 = vsel %vm131, %v637, %v639
  %v644 = vsel %vm131, %v639, %v637
  %v645 = vmul.f32 %v640, %v140
  %v646 = vmul.f32 %v644, %v144
  %647 = vrot.lane.b32.xlu0 %v586, 113
  %v648 = vpop.permute.xlu0 %647
  %649 = vrot.lane.b32.xlu0 %v587, 113
  %v650 = vpop.permute.xlu0 %649
  %v651 = vsel %vm151, %v648, %v650
  %v655 = vsel %vm151, %v650, %v648
  %v656 = vmul.f32 %v651, %v160
  %v657 = vmul.f32 %v655, %v164
  %658 = vrot.lane.b32.xlu0 %v586, 112
  %v659 = vpop.permute.xlu0 %658
  %660 = vrot.lane.b32.xlu0 %v587, 112
  %v661 = vpop.permute.xlu0 %660
  %v662 = vsel %vm171, %v659, %v661
  %v666 = vsel %vm171, %v661, %v659
  %v667 = vmul.f32 %v662, %v180
  %v668 = vmul.f32 %v666, %v184
  %669 = vrot.lane.b32.xlu0 %v586, 111
  %v670 = vpop.permute.xlu0 %669
  %671 = vrot.lane.b32.xlu0 %v587, 111
  %v672 = vpop.permute.xlu0 %671
  %v673 = vsel %vm191, %v670, %v672
  %v677 = vsel %vm191, %v672, %v670
  %v678 = vmul.f32 %v673, %v200
  %v679 = vmul.f32 %v677, %v204
  %681 = vset.pattern.permute.xlu0 0
  %682 = vperm.xlu0 %681, %v30
  %v683 = vpop.permute.xlu0 %682
  %vm685 = vcmask 588800
  %v687 = vsel %vm685, %v28, 0
  %689 = vmatprep.subr.mxu0 %v600
  %690 = vmatpush1.msra.mxu0 %v599
  %691 = vmatprep.subr.mxu0 %v611
  %692 = vmatpush1.msra.mxu0 %v610
  %693 = vmatprep.subr.mxu0 %v622
  %694 = vmatpush1.msra.mxu0 %v621
  %695 = vmatprep.subr.mxu0 %v633
  %696 = vmatpush1.msra.mxu0 %v632
  %697 = vmatprep.subr.mxu0 %v635
  %698 = vmatpush1.msra.mxu0 %v634
  %699 = vmatprep.subr.mxu0 %v646
  %700 = vmatpush1.msra.mxu0 %v645
  %701 = vmatprep.subr.mxu0 %v657
  %702 = vmatpush1.msra.mxu0 %v656
  %703 = vmatprep.subr.mxu0 %v668
  %704 = vmatpush1.msra.mxu0 %v667
  %705 = vmatprep.subr.mxu0 %v679
  %706 = vmatpush1.msra.mxu0 %v678
  %707 = vmatprep.subr.mxu0 0.0
  %708 = vmatpush1.msra.mxu0 0.0
  %709 = vmatprep.subr.mxu0 0.0
  %710 = vmatpush1.msra.mxu0 0.0
  %711 = vmatprep.subr.mxu0 0.0
  %712 = vmatpush1.msra.mxu0 0.0
  %713 = vmatprep.subr.mxu0 0.0
  %714 = vmatpush1.msra.mxu0 0.0
  %715 = vmatprep.subr.mxu0 0.0
  %716 = vmatpush1.msra.mxu0 0.0
  %717 = vmatprep.subr.mxu0 0.0
  %718 = vmatpush1.msra.mxu0 0.0
  %719 = vmatprep.subr.mxu0 0.0
  %720 = vmatpush1.msra.mxu0 0.0
  %721 = vmatprep.subr.mxu0 0.0
  %722 = vmatpush1.msra.mxu0 0.0
  %723 = vmatprep.subr.mxu0 0.0
  %724 = vmatpush1.msra.mxu0 0.0
  %725 = vmatprep.subr.mxu0 0.0
  %726 = vmatpush1.msra.mxu0 0.0
  %727 = vmatprep.subr.mxu0 0.0
  %728 = vmatpush1.msra.mxu0 0.0
  %729 = vmatprep.subr.mxu0 0.0
  %730 = vmatpush1.msra.mxu0 0.0
  %731 = vmatprep.subr.mxu0 0.0
  %732 = vmatpush1.msra.mxu0 0.0
  %733 = vmatprep.subr.mxu0 0.0
  %734 = vmatpush1.msra.mxu0 0.0
  %735 = vmatprep.subr.mxu0 0.0
  %736 = vmatpush1.msra.mxu0 0.0
  %737 = vmatprep.subr.mxu0 0.0
  %738 = vmatpush1.msra.mxu0 0.0
  %739 = vmatprep.subr.mxu0 0.0
  %740 = vmatpush1.msra.mxu0 0.0
  %741 = vmatprep.subr.mxu0 0.0
  %742 = vmatpush1.msra.mxu0 0.0
  %743 = vmatprep.subr.mxu0 0.0
  %744 = vmatpush1.msra.mxu0 0.0
  %745 = vmatprep.subr.mxu0 0.0
  %746 = vmatpush1.msra.mxu0 0.0
  %747 = vmatprep.subr.mxu0 0.0
  %748 = vmatpush1.msra.mxu0 0.0
  %749 = vmatprep.subr.mxu0 0.0
  %750 = vmatpush1.msra.mxu0 0.0
  %751 = vmatprep.subr.mxu0 0.0
  %752 = vmatpush1.msra.mxu0 0.0
  %753 = vmatprep.mubr.f32.mxu0 0.0
  %754 = vmatmul.mubr.f32.gmra.mrb[0].mxu0 %v687
  %v755 = vpop.f32.mrb[0].mxu0
  %v756 = vadd.f32 %v683, %v755
  %v757 = vpop.f32.mrb[0].mxu0
  %v758 = vadd.f32 %v683, %v757
  %759 = vdwg.mxu0
  %v760 = vadd.f32 %v756, %v758
  %761 = vadd.xlane.f32.xlu0 %v760
  %v762 = vpop.xlane.xlu0 %761
  %v763 = vadd.f32 %v762, 0.0
  %v764 = vmul.f32 %v756, %v756
  %v765 = vmul.f32 %v758, %v758
  %v766 = vadd.f32 %v764, %v765
  %767 = vadd.xlane.f32.xlu0 %v766
  %v768 = vpop.xlane.xlu0 %767
  %v769 = vadd.f32 %v768, 0.0
  %v770 = vmul.f32 %v540, %v571
  %v771 = vmul.f32 %v542, %v571
  %v772 = vadd.f32 %v770, %v578
  %v773 = vadd.f32 %v771, %v578
  %vm774 = vcmp.gt.f32.partialorder %v772, 0.0
  %vm775 = vcmp.gt.f32.partialorder %v773, 0.0
  %v776 = vmul.f32 %v772, 0.2
  %v777 = vmul.f32 %v773, 0.2
  %v778 = vsel %vm774, %v772, %v776
  %v779 = vsel %vm775, %v773, %v777
  %781 = vrot.lane.b32.xlu0 %v779, 17
  %v782 = vpop.permute.xlu0 %781
  %785 = vrot.lane.b32.xlu0 %v778, 17
  %v786 = vpop.permute.xlu0 %785
  %v787 = vsel %vm39, %v786, %v782
  %v790 = vsel %vm39, %v782, %v786
  %v791 = vmul.f32 %v790, %v47
  %v792 = vmul.f32 %v787, %v51
  %793 = vrot.lane.b32.xlu0 %v779, 16
  %v794 = vpop.permute.xlu0 %793
  %796 = vrot.lane.b32.xlu0 %v778, 16
  %v797 = vpop.permute.xlu0 %796
  %v798 = vsel %vm59, %v797, %v794
  %v801 = vsel %vm59, %v794, %v797
  %v802 = vmul.f32 %v801, %v67
  %v803 = vmul.f32 %v798, %v71
  %804 = vrot.lane.b32.xlu0 %v779, 15
  %v805 = vpop.permute.xlu0 %804
  %807 = vrot.lane.b32.xlu0 %v778, 15
  %v808 = vpop.permute.xlu0 %807
  %v809 = vsel %vm79, %v808, %v805
  %v812 = vsel %vm79, %v805, %v808
  %v813 = vmul.f32 %v812, %v87
  %v814 = vmul.f32 %v809, %v91
  %815 = vrot.lane.b32.xlu0 %v779, 1
  %v816 = vpop.permute.xlu0 %815
  %818 = vrot.lane.b32.xlu0 %v778, 1
  %v819 = vpop.permute.xlu0 %818
  %v820 = vsel %vm99, %v819, %v816
  %v823 = vsel %vm99, %v816, %v819
  %v824 = vmul.f32 %v823, %v107
  %v825 = vmul.f32 %v820, %v111
  %v826 = vmul.f32 %v778, %v117
  %v827 = vmul.f32 %v779, %v121
  %828 = vrot.lane.b32.xlu0 %v778, 127
  %v829 = vpop.permute.xlu0 %828
  %830 = vrot.lane.b32.xlu0 %v779, 127
  %v831 = vpop.permute.xlu0 %830
  %v832 = vsel %vm131, %v829, %v831
  %v836 = vsel %vm131, %v831, %v829
  %v837 = vmul.f32 %v832, %v140
  %v838 = vmul.f32 %v836, %v144
  %839 = vrot.lane.b32.xlu0 %v778, 113
  %v840 = vpop.permute.xlu0 %839
  %841 = vrot.lane.b32.xlu0 %v779, 113
  %v842 = vpop.permute.xlu0 %841
  %v843 = vsel %vm151, %v840, %v842
  %v847 = vsel %vm151, %v842, %v840
  %v848 = vmul.f32 %v843, %v160
  %v849 = vmul.f32 %v847, %v164
  %850 = vrot.lane.b32.xlu0 %v778, 112
  %v851 = vpop.permute.xlu0 %850
  %852 = vrot.lane.b32.xlu0 %v779, 112
  %v853 = vpop.permute.xlu0 %852
  %v854 = vsel %vm171, %v851, %v853
  %v858 = vsel %vm171, %v853, %v851
  %v859 = vmul.f32 %v854, %v180
  %v860 = vmul.f32 %v858, %v184
  %861 = vrot.lane.b32.xlu0 %v778, 111
  %v862 = vpop.permute.xlu0 %861
  %863 = vrot.lane.b32.xlu0 %v779, 111
  %v864 = vpop.permute.xlu0 %863
  %v865 = vsel %vm191, %v862, %v864
  %v869 = vsel %vm191, %v864, %v862
  %v870 = vmul.f32 %v865, %v200
  %v871 = vmul.f32 %v869, %v204
  %872 = vmatprep.subr.mxu0 %v792
  %873 = vmatpush1.msra.mxu0 %v791
  %874 = vmatprep.subr.mxu0 %v803
  %875 = vmatpush1.msra.mxu0 %v802
  %876 = vmatprep.subr.mxu0 %v814
  %877 = vmatpush1.msra.mxu0 %v813
  %878 = vmatprep.subr.mxu0 %v825
  %879 = vmatpush1.msra.mxu0 %v824
  %880 = vmatprep.subr.mxu0 %v827
  %881 = vmatpush1.msra.mxu0 %v826
  %882 = vmatprep.subr.mxu0 %v838
  %883 = vmatpush1.msra.mxu0 %v837
  %884 = vmatprep.subr.mxu0 %v849
  %885 = vmatpush1.msra.mxu0 %v848
  %886 = vmatprep.subr.mxu0 %v860
  %887 = vmatpush1.msra.mxu0 %v859
  %888 = vmatprep.subr.mxu0 %v871
  %889 = vmatpush1.msra.mxu0 %v870
  %890 = vmatprep.subr.mxu0 0.0
  %891 = vmatpush1.msra.mxu0 0.0
  %892 = vmatprep.subr.mxu0 0.0
  %893 = vmatpush1.msra.mxu0 0.0
  %894 = vmatprep.subr.mxu0 0.0
  %895 = vmatpush1.msra.mxu0 0.0
  %896 = vmatprep.subr.mxu0 0.0
  %897 = vmatpush1.msra.mxu0 0.0
  %898 = vmatprep.subr.mxu0 0.0
  %899 = vmatpush1.msra.mxu0 0.0
  %900 = vmatprep.subr.mxu0 0.0
  %901 = vmatpush1.msra.mxu0 0.0
  %902 = vmatprep.subr.mxu0 0.0
  %903 = vmatpush1.msra.mxu0 0.0
  %904 = vmatprep.subr.mxu0 0.0
  %905 = vmatpush1.msra.mxu0 0.0
  %906 = vmatprep.subr.mxu0 0.0
  %907 = vmatpush1.msra.mxu0 0.0
  %908 = vmatprep.subr.mxu0 0.0
  %909 = vmatpush1.msra.mxu0 0.0
  %910 = vmatprep.subr.mxu0 0.0
  %911 = vmatpush1.msra.mxu0 0.0
  %912 = vmatprep.subr.mxu0 0.0
  %913 = vmatpush1.msra.mxu0 0.0
  %914 = vmatprep.subr.mxu0 0.0
  %915 = vmatpush1.msra.mxu0 0.0
  %916 = vmatprep.subr.mxu0 0.0
  %917 = vmatpush1.msra.mxu0 0.0
  %918 = vmatprep.subr.mxu0 0.0
  %919 = vmatpush1.msra.mxu0 0.0
  %920 = vmatprep.subr.mxu0 0.0
  %921 = vmatpush1.msra.mxu0 0.0
  %922 = vmatprep.subr.mxu0 0.0
  %923 = vmatpush1.msra.mxu0 0.0
  %924 = vmatprep.subr.mxu0 0.0
  %925 = vmatpush1.msra.mxu0 0.0
  %926 = vmatprep.subr.mxu0 0.0
  %927 = vmatpush1.msra.mxu0 0.0
  %928 = vmatprep.subr.mxu0 0.0
  %929 = vmatpush1.msra.mxu0 0.0
  %930 = vmatprep.subr.mxu0 0.0
  %931 = vmatpush1.msra.mxu0 0.0
  %932 = vmatprep.subr.mxu0 0.0
  %933 = vmatpush1.msra.mxu0 0.0
  %934 = vmatprep.subr.mxu0 0.0
  %935 = vmatpush1.msra.mxu0 0.0
  %936 = vmatprep.mubr.f32.mxu0 0.0
  %937 = vmatmul.mubr.f32.gmra.mrb[0].mxu0 %v687
  %v938 = vpop.f32.mrb[0].mxu0
  %v939 = vadd.f32 %v683, %v938
  %v940 = vpop.f32.mrb[0].mxu0
  %v941 = vadd.f32 %v683, %v940
  %942 = vdwg.mxu0
  %v943 = vadd.f32 %v939, %v941
  %944 = vadd.xlane.f32.xlu0 %v943
  %v945 = vpop.xlane.xlu0 %944
  %v946 = vadd.f32 %v763, %v945
  %v947 = vmul.f32 %v939, %v939
  %v948 = vmul.f32 %v941, %v941
  %v949 = vadd.f32 %v947, %v948
  %950 = vadd.xlane.f32.xlu0 %v949
  %v951 = vpop.xlane.xlu0 %950
  %v952 = vadd.f32 %v769, %v951
  %v953 = vmul.f32 %v946, 0.001953125
  %v954 = vmul.f32 %v952, 0.001953125
  %v955 = vmul.f32 %v953, %v953
  %v956 = vsub.f32 %v954, %v955
  %v957 = vmax.f32 %v956, 0.0
  %v958 = vadd.f32 %v957, 1e-05
  %v959 = vrsqrt.pop %v958
  %v960 = vmul.f32 %v30, %v959
  %v961 = vmul.f32 %v953, %v960
  %963 = vrot.lane.b32.xlu0 %v961, 1
  %v964 = vpop.permute.xlu0 %963
  %v966 = vsub.f32 %v30, %v964
  %968 = vset.pattern.permute.xlu0 1
  %969 = vperm.xlu0 %968, %v960
  %v970 = vpop.permute.xlu0 %969
  %v972 = vmul.f32 %v756, %v970
  %v973 = vmul.f32 %v758, %v970
  %975 = vset.pattern.permute.xlu0 2
  %976 = vperm.xlu0 %975, %v966
  %v977 = vpop.permute.xlu0 %976
  %v979 = vadd.f32 %v972, %v977
  %v980 = vadd.f32 %v973, %v977
  %vm981 = vcmp.gt.f32.partialorder %v979, 0.0
  %vm982 = vcmp.gt.f32.partialorder %v980, 0.0
  %v983 = vmul.f32 %v979, 0.2
  %v984 = vmul.f32 %v980, 0.2
  %v985 = vsel %vm981, %v979, %v983
  %v986 = vsel %vm982, %v980, %v984
  %987 = vst [vmem:[%s6] sm:$0xff] %v985
  %988 = vst [vmem:[%s6 + $0x8] sm:$0xff] %v986
  %v989 = vmul.f32 %v939, %v970
  %v990 = vmul.f32 %v941, %v970
  %v991 = vadd.f32 %v989, %v977
  %v992 = vadd.f32 %v990, %v977
  %vm993 = vcmp.gt.f32.partialorder %v991, 0.0
  %vm994 = vcmp.gt.f32.partialorder %v992, 0.0
  %v995 = vmul.f32 %v991, 0.2
  %v996 = vmul.f32 %v992, 0.2
  %v997 = vsel %vm993, %v991, %v995
  %v998 = vsel %vm994, %v992, %v996
  %s999 = scalar_lea.vmem %s6, 16
  %1000 = vst [vmem:[%s999] sm:$0xff] %v997
  %1001 = vst [vmem:[%s999 + $0x8] sm:$0xff] %v998
  // Predicated region
  $region26: #{double_conv.1} parent=0 // pred_check
    _
  $region27: #{double_conv.1} parent=0 // pred_check_branch
    %1003 = sbr.rel (0) target = $region29
  $region28: #{double_conv.1} parent=0 // pred_region
    _
  $region29: #{double_conv.1} parent=0 // pred_fallthru
    _
  // Predicated region
  $region30: #{double_conv.1} parent=0 // pred_check
    _
  $region31: #{double_conv.1} parent=0 // pred_check_branch
    %1005 = sbr.rel (0) target = $region33
  $region32: #{double_conv.1} parent=0 // pred_region
    _
  $region33: #{double_conv.1} parent=0 // pred_fallthru
    _

</llo_original>
